<compile_context>
chip_gen: v7x
topology: tpu7x:2x2x1
jax: 0.10.0
libtpu: 0.0.40
codegen_flags: <defaults>
</compile_context>

<pallas_src>
import numpy as np
import jax
import jax.numpy as jnp
from jax.experimental import pallas as pl
from jax.experimental.pallas import tpu as pltpu


def _dft_mats(n):
    """Ortho-normalized forward DFT matrix (real, imag) for size n."""
    j = np.arange(n)
    ang = -2.0 * np.pi * np.outer(j, j) / n
    scale = 1.0 / np.sqrt(n)
    fwd = np.exp(1j * ang) * scale          # exp(-2*pi*i*j*k/N)/sqrt(N)
    return fwd.real.astype(np.float32), fwd.imag.astype(np.float32)


def _pick_batch_block(B, H):
    """Largest divisor of B (<=8) so that bB*H ~ fills the MXU M dimension."""
    target = max(1, 256 // max(H, 1))
    best = 1
    for d in range(1, B + 1):
        if B % d == 0 and d <= target and d <= 8:
            best = d
    return best


def _dc_kernel(x_ref, mkr_ref, mki_ref, onem_ref,
               fhr_ref, fhi_ref, fwr_ref, fwi_ref,
               o_ref, vr_ref, vi_ref):
    bB, H, W = x_ref.shape

    fhr, fhi = fhr_ref[...], fhi_ref[...]   # (H, H) forward DFT (rows)
    fwr, fwi = fwr_ref[...], fwi_ref[...]   # (W, W) forward DFT (cols)
    # Inverse (ortho) DFT is the conjugate: ihr = fhr, ihi = -fhi (same for W);
    # the negations are folded directly into the add/subs below.

    dot = lambda a, b: jnp.dot(a, b, preferred_element_type=jnp.float32)

    # ---- Stage 1: batched row transform  Y = X @ F_W  (X real) ----
    # Stack all bB images' rows so the MXU M dim is bB*H instead of H.
    x2d = x_ref[...].reshape(bB * H, W)
    yr = dot(x2d, fwr)
    yi = dot(x2d, fwi)

    # ---- Stages 2-4 (per image): column DFT, k-space merge, column IDFT ----
    for b in range(bB):                      # bB is small & static
        yr_b = yr[b * H:(b + 1) * H]
        yi_b = yi[b * H:(b + 1) * H]

        # K_b = F_H @ Y_b  (complex)
        kr = dot(fhr, yr_b) - dot(fhi, yi_b)
        ki = dot(fhr, yi_b) + dot(fhi, yr_b)

        # Data-consistency merge: U = m*K_us + (1-m)*K  (m*K_us pre-computed).
        onem = onem_ref[b]
        ur = mkr_ref[b] + onem * kr
        ui = mki_ref[b] + onem * ki

        # V_b = IF_H @ U_b,  IF_H = conj(F_H) = fhr - i*fhi
        vr_ref[b * H:(b + 1) * H, :] = dot(fhr, ur) + dot(fhi, ui)
        vi_ref[b * H:(b + 1) * H, :] = dot(fhr, ui) - dot(fhi, ur)

    # ---- Stage 5: batched row inverse transform, real part only ----
    # Z = Re(V @ IF_W),  IF_W = conj(F_W)  =>  Zr = Vr@fwr + Vi@fwi
    zr = dot(vr_ref[...], fwr) + dot(vi_ref[...], fwi)
    o_ref[...] = zr.reshape(bB, 1, H, W).astype(o_ref.dtype)


def data_consistency_layer(predicted_img, us_kspace, us_mask):
    """predicted_img: (B,C,H,W); us_kspace: (B,H,W,2); us_mask: (B,H,W).
    Returns (B,1,H,W) f32 — real part of the data-consistent image."""
    B, C, H, W = predicted_img.shape
    assert C >= 1  # channel 0 is used, matching the PyTorch module

    bB = _pick_batch_block(B, H)
    grid = (B // bB,)

    # Forward DFT matrices only; the inverse is derived in-kernel (conjugate).
    fhr, fhi = map(jnp.asarray, _dft_mats(H))
    fwr, fwi = map(jnp.asarray, _dft_mats(W))

    # Glue (fused into input producers by XLA):
    x0 = predicted_img[:, 0, :, :].astype(jnp.float32)        # (B, H, W)
    m = us_mask.astype(jnp.float32)
    mk_r = m * us_kspace[..., 0].astype(jnp.float32)           # m * Re(k_us)
    mk_i = m * us_kspace[..., 1].astype(jnp.float32)           # m * Im(k_us)
    one_m = 1.0 - m

    bspec_hw = pl.BlockSpec((bB, H, W), lambda b: (b, 0, 0))
    bspec_out = pl.BlockSpec((bB, 1, H, W), lambda b: (b, 0, 0, 0))
    bspec_h = pl.BlockSpec((H, H), lambda b: (0, 0))   # constant block index:
    bspec_w = pl.BlockSpec((W, W), lambda b: (0, 0))   # DMA'd once, stays resident

    # Cost estimate: 12 complex-expanded matmuls per image.
    flops = B * (8 * H * W * W + 16 * H * H * W)
    bytes_accessed = 5 * B * H * W * 4 + 2 * (H * H + W * W) * 4
    cost = pl.CostEstimate(flops=flops, transcendentals=0,
                           bytes_accessed=bytes_accessed)

    # VMEM budget: 4 in + 1 out HW tiles (double-buffered), 4 constant planes
    # (double-buffered), 2 scratch planes, plus live intermediates; clamp to a
    # value that is valid on v5e/v6e (128 MiB) and v7x (64 MiB physical).
    tile = bB * H * W * 4
    est = 2 * 5 * tile + 2 * 4 * max(H * H, W * W) * 4 + 2 * tile + 10 * tile
    vmem_limit = int(max(32 << 20, min(int(est * 1.5), 64 << 20)))

    out = pl.pallas_call(
        _dc_kernel,
        out_shape=jax.ShapeDtypeStruct((B, 1, H, W), jnp.float32),
        grid_spec=pltpu.PrefetchScalarGridSpec(
            num_scalar_prefetch=0,
            grid=grid,
            in_specs=[
                bspec_hw,                     # predicted image (channel 0)
                bspec_hw, bspec_hw,           # pre-masked k-space real / imag
                bspec_hw,                     # (1 - mask)
                bspec_h, bspec_h,             # F_H real / imag
                bspec_w, bspec_w,             # F_W real / imag
            ],
            out_specs=bspec_out,
            scratch_shapes=[
                pltpu.VMEM((bB * H, W), jnp.float32),   # Vr
                pltpu.VMEM((bB * H, W), jnp.float32),   # Vi
            ],
        ),
        compiler_params=pltpu.CompilerParams(
            dimension_semantics=("parallel",),
            vmem_limit_bytes=vmem_limit),
        cost_estimate=cost,
    )(x0, mk_r, mk_i, one_m, fhr, fhi, fwr, fwi)
    return out


def _reference(predicted_img, us_kspace, us_mask):
    """Plain-JAX reference mirroring the PyTorch forward."""
    x = predicted_img[:, 0, :, :]
    k_pred = jnp.fft.fft2(x, norm="ortho")
    k_us = us_kspace[..., 0] + 1j * us_kspace[..., 1]
    k_upd = us_mask * k_us + (1.0 - us_mask) * k_pred
    img = jnp.fft.ifft2(k_upd, norm="ortho")
    return jnp.real(img)[:, None, :, :].astype(jnp.float32)


if __name__ == "__main__":
    B, C, H, W = 2, 1, 16, 16
    key = jax.random.PRNGKey(0)
    k1, k2, k3 = jax.random.split(key, 3)

    predicted_img = jax.random.normal(k1, (B, C, H, W), dtype=jnp.float32)
    us_kspace = jax.random.normal(k2, (B, H, W, 2), dtype=jnp.float32)
    us_mask = (jax.random.uniform(k3, (B, H, W)) > 0.5).astype(jnp.float32)

    out = data_consistency_layer(predicted_img, us_kspace, us_mask)
    out = jax.block_until_ready(out)

    ref = _reference(predicted_img, us_kspace, us_mask)
    assert out.shape == (B, 1, H, W) and out.dtype == jnp.float32
    np.testing.assert_allclose(np.asarray(out), np.asarray(ref), rtol=1e-3, atol=1e-3)

    print("KERNEL_OK")
</pallas_src>

<mosaic_0001>
module attributes {stable_mosaic.version = 11 : i64} {
  func.func @_dc_kernel(%arg0: i32, %arg1: memref<2x16x16xf32, #tpu.memory_space<vmem>>, %arg2: memref<2x16x16xf32, #tpu.memory_space<vmem>>, %arg3: memref<2x16x16xf32, #tpu.memory_space<vmem>>, %arg4: memref<2x16x16xf32, #tpu.memory_space<vmem>>, %arg5: memref<16x16xf32, #tpu.memory_space<vmem>>, %arg6: memref<16x16xf32, #tpu.memory_space<vmem>>, %arg7: memref<16x16xf32, #tpu.memory_space<vmem>>, %arg8: memref<16x16xf32, #tpu.memory_space<vmem>>, %arg9: memref<2x1x16x16xf32, #tpu.memory_space<vmem>>, %arg10: memref<32x16xf32, #tpu.memory_space<vmem>>, %arg11: memref<32x16xf32, #tpu.memory_space<vmem>>) attributes {dimension_semantics = [#tpu.dimension_semantics<parallel>], iteration_bounds = array<i64: 1>, scalar_prefetch = 0 : i64, scratch_operands = 2 : i64, tpu.core_type = #tpu.core_type<tc>, window_params = [{transform_indices = @transform_0, window_bounds = array<i64: 2, 16, 16>}, {transform_indices = @transform_1, window_bounds = array<i64: 2, 16, 16>}, {transform_indices = @transform_2, window_bounds = array<i64: 2, 16, 16>}, {transform_indices = @transform_3, window_bounds = array<i64: 2, 16, 16>}, {pipeline_mode = #tpu.pipeline_mode<synchronous>, transform_indices = @transform_4, window_bounds = array<i64: 16, 16>}, {pipeline_mode = #tpu.pipeline_mode<synchronous>, transform_indices = @transform_5, window_bounds = array<i64: 16, 16>}, {pipeline_mode = #tpu.pipeline_mode<synchronous>, transform_indices = @transform_6, window_bounds = array<i64: 16, 16>}, {pipeline_mode = #tpu.pipeline_mode<synchronous>, transform_indices = @transform_7, window_bounds = array<i64: 16, 16>}, {transform_indices = @transform_8, window_bounds = array<i64: 2, 1, 16, 16>}]} {
    %c0 = arith.constant 0 : index
    %c0_0 = arith.constant 0 : index
    %0 = vector.load %arg5[%c0, %c0_0] : memref<16x16xf32, #tpu.memory_space<vmem>>, vector<16x16xf32>
    %c0_1 = arith.constant 0 : index
    %c0_2 = arith.constant 0 : index
    %1 = vector.load %arg6[%c0_1, %c0_2] : memref<16x16xf32, #tpu.memory_space<vmem>>, vector<16x16xf32>
    %c0_3 = arith.constant 0 : index
    %c0_4 = arith.constant 0 : index
    %2 = vector.load %arg7[%c0_3, %c0_4] : memref<16x16xf32, #tpu.memory_space<vmem>>, vector<16x16xf32>
    %c0_5 = arith.constant 0 : index
    %c0_6 = arith.constant 0 : index
    %3 = vector.load %arg8[%c0_5, %c0_6] : memref<16x16xf32, #tpu.memory_space<vmem>>, vector<16x16xf32>
    %c0_7 = arith.constant 0 : index
    %c0_8 = arith.constant 0 : index
    %c0_9 = arith.constant 0 : index
    %4 = vector.load %arg1[%c0_7, %c0_8, %c0_9] : memref<2x16x16xf32, #tpu.memory_space<vmem>>, vector<2x16x16xf32>
    %5 = vector.shape_cast %4 : vector<2x16x16xf32> to vector<32x16xf32>
    %cst = arith.constant dense<0.000000e+00> : vector<32x16xf32>
    %6 = tpu.matmul %5, %2, %cst {dimension_numbers = #tpu.dot_dimension_numbers<[1], [0], [0], [1], [0, 0, 1, 1], [], []>} : vector<32x16xf32>, vector<16x16xf32>, vector<32x16xf32> -> vector<32x16xf32>
    %cst_10 = arith.constant dense<0.000000e+00> : vector<32x16xf32>
    %7 = tpu.matmul %5, %3, %cst_10 {dimension_numbers = #tpu.dot_dimension_numbers<[1], [0], [0], [1], [0, 0, 1, 1], [], []>} : vector<32x16xf32>, vector<16x16xf32>, vector<32x16xf32> -> vector<32x16xf32>
    %8 = vector.extract_strided_slice %6 {offsets = [0, 0], sizes = [16, 16], strides = [1, 1]} : vector<32x16xf32> to vector<16x16xf32>
    %9 = vector.extract_strided_slice %7 {offsets = [0, 0], sizes = [16, 16], strides = [1, 1]} : vector<32x16xf32> to vector<16x16xf32>
    %cst_11 = arith.constant dense<0.000000e+00> : vector<16x16xf32>
    %10 = tpu.matmul %0, %8, %cst_11 {dimension_numbers = #tpu.dot_dimension_numbers<[1], [0], [0], [1], [0, 0, 1, 1], [], []>} : vector<16x16xf32>, vector<16x16xf32>, vector<16x16xf32> -> vector<16x16xf32>
    %cst_12 = arith.constant dense<0.000000e+00> : vector<16x16xf32>
    %11 = tpu.matmul %1, %9, %cst_12 {dimension_numbers = #tpu.dot_dimension_numbers<[1], [0], [0], [1], [0, 0, 1, 1], [], []>} : vector<16x16xf32>, vector<16x16xf32>, vector<16x16xf32> -> vector<16x16xf32>
    %12 = arith.subf %10, %11 : vector<16x16xf32>
    %cst_13 = arith.constant dense<0.000000e+00> : vector<16x16xf32>
    %13 = tpu.matmul %0, %9, %cst_13 {dimension_numbers = #tpu.dot_dimension_numbers<[1], [0], [0], [1], [0, 0, 1, 1], [], []>} : vector<16x16xf32>, vector<16x16xf32>, vector<16x16xf32> -> vector<16x16xf32>
    %cst_14 = arith.constant dense<0.000000e+00> : vector<16x16xf32>
    %14 = tpu.matmul %1, %8, %cst_14 {dimension_numbers = #tpu.dot_dimension_numbers<[1], [0], [0], [1], [0, 0, 1, 1], [], []>} : vector<16x16xf32>, vector<16x16xf32>, vector<16x16xf32> -> vector<16x16xf32>
    %15 = arith.addf %13, %14 : vector<16x16xf32>
    %c0_15 = arith.constant 0 : index
    %c0_16 = arith.constant 0 : index
    %c0_17 = arith.constant 0 : index
    %16 = vector.load %arg4[%c0_15, %c0_16, %c0_17] : memref<2x16x16xf32, #tpu.memory_space<vmem>>, vector<1x16x16xf32>
    %17 = vector.shape_cast %16 : vector<1x16x16xf32> to vector<16x16xf32>
    %c0_18 = arith.constant 0 : index
    %c0_19 = arith.constant 0 : index
    %c0_20 = arith.constant 0 : index
    %18 = vector.load %arg2[%c0_18, %c0_19, %c0_20] : memref<2x16x16xf32, #tpu.memory_space<vmem>>, vector<1x16x16xf32>
    %19 = vector.shape_cast %18 : vector<1x16x16xf32> to vector<16x16xf32>
    %20 = arith.mulf %17, %12 : vector<16x16xf32>
    %21 = arith.addf %19, %20 : vector<16x16xf32>
    %c0_21 = arith.constant 0 : index
    %c0_22 = arith.constant 0 : index
    %c0_23 = arith.constant 0 : index
    %22 = vector.load %arg3[%c0_21, %c0_22, %c0_23] : memref<2x16x16xf32, #tpu.memory_space<vmem>>, vector<1x16x16xf32>
    %23 = vector.shape_cast %22 : vector<1x16x16xf32> to vector<16x16xf32>
    %24 = arith.mulf %17, %15 : vector<16x16xf32>
    %25 = arith.addf %23, %24 : vector<16x16xf32>
    %cst_24 = arith.constant dense<0.000000e+00> : vector<16x16xf32>
    %26 = tpu.matmul %0, %21, %cst_24 {dimension_numbers = #tpu.dot_dimension_numbers<[1], [0], [0], [1], [0, 0, 1, 1], [], []>} : vector<16x16xf32>, vector<16x16xf32>, vector<16x16xf32> -> vector<16x16xf32>
    %cst_25 = arith.constant dense<0.000000e+00> : vector<16x16xf32>
    %27 = tpu.matmul %1, %25, %cst_25 {dimension_numbers = #tpu.dot_dimension_numbers<[1], [0], [0], [1], [0, 0, 1, 1], [], []>} : vector<16x16xf32>, vector<16x16xf32>, vector<16x16xf32> -> vector<16x16xf32>
    %28 = arith.addf %26, %27 : vector<16x16xf32>
    %c0_26 = arith.constant 0 : index
    %c0_27 = arith.constant 0 : index
    %29 = vector.load %arg10[%c0_26, %c0_27] : memref<32x16xf32, #tpu.memory_space<vmem>>, vector<16x16xf32>
    tpu.vector_store %arg10[%c0_26, %c0_27], %28 {strides = array<i32>} : memref<32x16xf32, #tpu.memory_space<vmem>>, vector<16x16xf32>,
    %cst_28 = arith.constant dense<0.000000e+00> : vector<16x16xf32>
    %30 = tpu.matmul %0, %25, %cst_28 {dimension_numbers = #tpu.dot_dimension_numbers<[1], [0], [0], [1], [0, 0, 1, 1], [], []>} : vector<16x16xf32>, vector<16x16xf32>, vector<16x16xf32> -> vector<16x16xf32>
    %cst_29 = arith.constant dense<0.000000e+00> : vector<16x16xf32>
    %31 = tpu.matmul %1, %21, %cst_29 {dimension_numbers = #tpu.dot_dimension_numbers<[1], [0], [0], [1], [0, 0, 1, 1], [], []>} : vector<16x16xf32>, vector<16x16xf32>, vector<16x16xf32> -> vector<16x16xf32>
    %32 = arith.subf %30, %31 : vector<16x16xf32>
    %c0_30 = arith.constant 0 : index
    %c0_31 = arith.constant 0 : index
    %33 = vector.load %arg11[%c0_30, %c0_31] : memref<32x16xf32, #tpu.memory_space<vmem>>, vector<16x16xf32>
    tpu.vector_store %arg11[%c0_30, %c0_31], %32 {strides = array<i32>} : memref<32x16xf32, #tpu.memory_space<vmem>>, vector<16x16xf32>,
    %34 = vector.extract_strided_slice %6 {offsets = [16, 0], sizes = [16, 16], strides = [1, 1]} : vector<32x16xf32> to vector<16x16xf32>
    %35 = vector.extract_strided_slice %7 {offsets = [16, 0], sizes = [16, 16], strides = [1, 1]} : vector<32x16xf32> to vector<16x16xf32>
    %cst_32 = arith.constant dense<0.000000e+00> : vector<16x16xf32>
    %36 = tpu.matmul %0, %34, %cst_32 {dimension_numbers = #tpu.dot_dimension_numbers<[1], [0], [0], [1], [0, 0, 1, 1], [], []>} : vector<16x16xf32>, vector<16x16xf32>, vector<16x16xf32> -> vector<16x16xf32>
    %cst_33 = arith.constant dense<0.000000e+00> : vector<16x16xf32>
    %37 = tpu.matmul %1, %35, %cst_33 {dimension_numbers = #tpu.dot_dimension_numbers<[1], [0], [0], [1], [0, 0, 1, 1], [], []>} : vector<16x16xf32>, vector<16x16xf32>, vector<16x16xf32> -> vector<16x16xf32>
    %38 = arith.subf %36, %37 : vector<16x16xf32>
    %cst_34 = arith.constant dense<0.000000e+00> : vector<16x16xf32>
    %39 = tpu.matmul %0, %35, %cst_34 {dimension_numbers = #tpu.dot_dimension_numbers<[1], [0], [0], [1], [0, 0, 1, 1], [], []>} : vector<16x16xf32>, vector<16x16xf32>, vector<16x16xf32> -> vector<16x16xf32>
    %cst_35 = arith.constant dense<0.000000e+00> : vector<16x16xf32>
    %40 = tpu.matmul %1, %34, %cst_35 {dimension_numbers = #tpu.dot_dimension_numbers<[1], [0], [0], [1], [0, 0, 1, 1], [], []>} : vector<16x16xf32>, vector<16x16xf32>, vector<16x16xf32> -> vector<16x16xf32>
    %41 = arith.addf %39, %40 : vector<16x16xf32>
    %c1 = arith.constant 1 : index
    %c0_36 = arith.constant 0 : index
    %c0_37 = arith.constant 0 : index
    %42 = vector.load %arg4[%c1, %c0_36, %c0_37] : memref<2x16x16xf32, #tpu.memory_space<vmem>>, vector<1x16x16xf32>
    %43 = vector.shape_cast %42 : vector<1x16x16xf32> to vector<16x16xf32>
    %c1_38 = arith.constant 1 : index
    %c0_39 = arith.constant 0 : index
    %c0_40 = arith.constant 0 : index
    %44 = vector.load %arg2[%c1_38, %c0_39, %c0_40] : memref<2x16x16xf32, #tpu.memory_space<vmem>>, vector<1x16x16xf32>
    %45 = vector.shape_cast %44 : vector<1x16x16xf32> to vector<16x16xf32>
    %46 = arith.mulf %43, %38 : vector<16x16xf32>
    %47 = arith.addf %45, %46 : vector<16x16xf32>
    %c1_41 = arith.constant 1 : index
    %c0_42 = arith.constant 0 : index
    %c0_43 = arith.constant 0 : index
    %48 = vector.load %arg3[%c1_41, %c0_42, %c0_43] : memref<2x16x16xf32, #tpu.memory_space<vmem>>, vector<1x16x16xf32>
    %49 = vector.shape_cast %48 : vector<1x16x16xf32> to vector<16x16xf32>
    %50 = arith.mulf %43, %41 : vector<16x16xf32>
    %51 = arith.addf %49, %50 : vector<16x16xf32>
    %cst_44 = arith.constant dense<0.000000e+00> : vector<16x16xf32>
    %52 = tpu.matmul %0, %47, %cst_44 {dimension_numbers = #tpu.dot_dimension_numbers<[1], [0], [0], [1], [0, 0, 1, 1], [], []>} : vector<16x16xf32>, vector<16x16xf32>, vector<16x16xf32> -> vector<16x16xf32>
    %cst_45 = arith.constant dense<0.000000e+00> : vector<16x16xf32>
    %53 = tpu.matmul %1, %51, %cst_45 {dimension_numbers = #tpu.dot_dimension_numbers<[1], [0], [0], [1], [0, 0, 1, 1], [], []>} : vector<16x16xf32>, vector<16x16xf32>, vector<16x16xf32> -> vector<16x16xf32>
    %54 = arith.addf %52, %53 : vector<16x16xf32>
    %c16 = arith.constant 16 : index
    %c0_46 = arith.constant 0 : index
    %55 = vector.load %arg10[%c16, %c0_46] : memref<32x16xf32, #tpu.memory_space<vmem>>, vector<16x16xf32>
    tpu.vector_store %arg10[%c16, %c0_46], %54 {strides = array<i32>} : memref<32x16xf32, #tpu.memory_space<vmem>>, vector<16x16xf32>,
    %cst_47 = arith.constant dense<0.000000e+00> : vector<16x16xf32>
    %56 = tpu.matmul %0, %51, %cst_47 {dimension_numbers = #tpu.dot_dimension_numbers<[1], [0], [0], [1], [0, 0, 1, 1], [], []>} : vector<16x16xf32>, vector<16x16xf32>, vector<16x16xf32> -> vector<16x16xf32>
    %cst_48 = arith.constant dense<0.000000e+00> : vector<16x16xf32>
    %57 = tpu.matmul %1, %47, %cst_48 {dimension_numbers = #tpu.dot_dimension_numbers<[1], [0], [0], [1], [0, 0, 1, 1], [], []>} : vector<16x16xf32>, vector<16x16xf32>, vector<16x16xf32> -> vector<16x16xf32>
    %58 = arith.subf %56, %57 : vector<16x16xf32>
    %c16_49 = arith.constant 16 : index
    %c0_50 = arith.constant 0 : index
    %59 = vector.load %arg11[%c16_49, %c0_50] : memref<32x16xf32, #tpu.memory_space<vmem>>, vector<16x16xf32>
    tpu.vector_store %arg11[%c16_49, %c0_50], %58 {strides = array<i32>} : memref<32x16xf32, #tpu.memory_space<vmem>>, vector<16x16xf32>,
    %c0_51 = arith.constant 0 : index
    %c0_52 = arith.constant 0 : index
    %60 = vector.load %arg10[%c0_51, %c0_52] : memref<32x16xf32, #tpu.memory_space<vmem>>, vector<32x16xf32>
    %cst_53 = arith.constant dense<0.000000e+00> : vector<32x16xf32>
    %61 = tpu.matmul %60, %2, %cst_53 {dimension_numbers = #tpu.dot_dimension_numbers<[1], [0], [0], [1], [0, 0, 1, 1], [], []>} : vector<32x16xf32>, vector<16x16xf32>, vector<32x16xf32> -> vector<32x16xf32>
    %c0_54 = arith.constant 0 : index
    %c0_55 = arith.constant 0 : index
    %62 = vector.load %arg11[%c0_54, %c0_55] : memref<32x16xf32, #tpu.memory_space<vmem>>, vector<32x16xf32>
    %cst_56 = arith.constant dense<0.000000e+00> : vector<32x16xf32>
    %63 = tpu.matmul %62, %3, %cst_56 {dimension_numbers = #tpu.dot_dimension_numbers<[1], [0], [0], [1], [0, 0, 1, 1], [], []>} : vector<32x16xf32>, vector<16x16xf32>, vector<32x16xf32> -> vector<32x16xf32>
    %64 = arith.addf %61, %63 : vector<32x16xf32>
    %65 = vector.shape_cast %64 : vector<32x16xf32> to vector<2x1x16x16xf32>
    %c0_57 = arith.constant 0 : index
    %c0_58 = arith.constant 0 : index
    %c0_59 = arith.constant 0 : index
    %c0_60 = arith.constant 0 : index
    %66 = vector.load %arg9[%c0_57, %c0_58, %c0_59, %c0_60] : memref<2x1x16x16xf32, #tpu.memory_space<vmem>>, vector<2x1x16x16xf32>
    tpu.vector_store %arg9[%c0_57, %c0_58, %c0_59, %c0_60], %65 {strides = array<i32>} : memref<2x1x16x16xf32, #tpu.memory_space<vmem>>, vector<2x1x16x16xf32>,
    return
  }
  func.func @transform_0(%arg0: i32) -> (i32, i32, i32) {
    %c0_i32 = arith.constant 0 : i32
    %c0_i32_0 = arith.constant 0 : i32
    %c0_i32_1 = arith.constant 0 : i32
    return %arg0, %c0_i32, %c0_i32_0 : i32, i32, i32
  }
  func.func @transform_1(%arg0: i32) -> (i32, i32, i32) {
    %c0_i32 = arith.constant 0 : i32
    %c0_i32_0 = arith.constant 0 : i32
    %c0_i32_1 = arith.constant 0 : i32
    return %arg0, %c0_i32, %c0_i32_0 : i32, i32, i32
  }
  func.func @transform_2(%arg0: i32) -> (i32, i32, i32) {
    %c0_i32 = arith.constant 0 : i32
    %c0_i32_0 = arith.constant 0 : i32
    %c0_i32_1 = arith.constant 0 : i32
    return %arg0, %c0_i32, %c0_i32_0 : i32, i32, i32
  }
  func.func @transform_3(%arg0: i32) -> (i32, i32, i32) {
    %c0_i32 = arith.constant 0 : i32
    %c0_i32_0 = arith.constant 0 : i32
    %c0_i32_1 = arith.constant 0 : i32
    return %arg0, %c0_i32, %c0_i32_0 : i32, i32, i32
  }
  func.func @transform_4(%arg0: i32) -> (i32, i32) {
    %c0_i32 = arith.constant 0 : i32
    %c0_i32_0 = arith.constant 0 : i32
    %c0_i32_1 = arith.constant 0 : i32
    return %c0_i32, %c0_i32_0 : i32, i32
  }
  func.func @transform_5(%arg0: i32) -> (i32, i32) {
    %c0_i32 = arith.constant 0 : i32
    %c0_i32_0 = arith.constant 0 : i32
    %c0_i32_1 = arith.constant 0 : i32
    return %c0_i32, %c0_i32_0 : i32, i32
  }
  func.func @transform_6(%arg0: i32) -> (i32, i32) {
    %c0_i32 = arith.constant 0 : i32
    %c0_i32_0 = arith.constant 0 : i32
    %c0_i32_1 = arith.constant 0 : i32
    return %c0_i32, %c0_i32_0 : i32, i32
  }
  func.func @transform_7(%arg0: i32) -> (i32, i32) {
    %c0_i32 = arith.constant 0 : i32
    %c0_i32_0 = arith.constant 0 : i32
    %c0_i32_1 = arith.constant 0 : i32
    return %c0_i32, %c0_i32_0 : i32, i32
  }
  func.func @transform_8(%arg0: i32) -> (i32, i32, i32, i32) {
    %c0_i32 = arith.constant 0 : i32
    %c0_i32_0 = arith.constant 0 : i32
    %c0_i32_1 = arith.constant 0 : i32
    %c0_i32_2 = arith.constant 0 : i32
    return %arg0, %c0_i32, %c0_i32_0, %c0_i32_1 : i32, i32, i32, i32
  }
}

</mosaic_0001>

<llo_original>
// kernel: tpu_custom_call.1
$region0: #{tpu_custom_call.1}
  #allocation0 [shape = 'u32[]', space=smem, size = 0x4, offset = 0x4, fixed_abs, tag = 'smem constant byte address 0x4 - core index']
  #allocation1 [shape = 'u32[144,128]{1,0:T(1,128)}', space=vmem, size = 0x12000, scoped, tag = 'internal scratch']
  #allocation2 [shape = 'f32[32,16]{1,0:T(8,128)}', space=vmem, size = 0x4000, scoped, tag = 'scratch operand']
  #allocation3 [shape = 'f32[32,16]{1,0:T(8,128)}', space=vmem, size = 0x4000, scoped, tag = 'scratch operand']
  %s0 = inlined_call_operand.hbm [shape: f32[2,16,16], index: 0, kind: input, shape index: {}]
  %s1 = inlined_call_operand.hbm [shape: f32[2,16,16], index: 1, kind: input, shape index: {}]
  %s2 = inlined_call_operand.hbm [shape: f32[2,16,16], index: 2, kind: input, shape index: {}]
  %s3 = inlined_call_operand.hbm [shape: f32[2,16,16], index: 3, kind: input, shape index: {}]
  %s4 = inlined_call_operand.hbm [shape: f32[16,16], index: 4, kind: input, shape index: {}]
  %s5 = inlined_call_operand.vmem [shape: f32[16,16], index: 5, kind: input, shape index: {}]
  %s6 = inlined_call_operand.hbm [shape: f32[16,16], index: 6, kind: input, shape index: {}]
  %s7 = inlined_call_operand.hbm [shape: f32[16,16], index: 7, kind: input, shape index: {}]
  %s8 = inlined_call_operand.hbm [shape: f32[2,1,16,16], index: 8, kind: output, shape index: {}]
  %s9 = sld [smem:[#allocation0]]
  $region70: #{tpu_custom_call.1} parent=0
    _
  %s11 = ssub.s32 1, %s9
  %s12 = scalar_select 0, %s11, %s9
  $region1: #{tpu_custom_call.1} parent=0
    #allocation4 [shape = 'u8[16384]{0}', space=vmem, size = 0x4000, scoped, tag = 'input window, operand 0, single buffered']
    #allocation5 [shape = 's32[1]{0}', space=sflag, size = 0x4, scoped, tag = 'scoped memory for tpu_custom_call.1']
    #allocation6 [shape = 's32[1]{0}', space=sflag, size = 0x4, scoped, tag = 'scoped memory for tpu_custom_call.1']
    #allocation7 [shape = 'u8[16384]{0}', space=vmem, size = 0x4000, scoped, tag = 'input window, operand 1, single buffered']
    #allocation8 [shape = 's32[1]{0}', space=sflag, size = 0x4, scoped, tag = 'scoped memory for tpu_custom_call.1']
    #allocation9 [shape = 'u8[16384]{0}', space=vmem, size = 0x4000, scoped, tag = 'input window, operand 2, single buffered']
    #allocation10 [shape = 'u8[16384]{0}', space=vmem, size = 0x4000, scoped, tag = 'input window, operand 3, single buffered']
    #allocation11 [shape = 's32[1]{0}', space=sflag, size = 0x4, scoped, tag = 'scoped memory for tpu_custom_call.1']
    #allocation12 [shape = 'u8[8192]{0}', space=vmem, size = 0x2000, scoped, tag = 'input window, operand 4, single buffered']
    #allocation13 [shape = 'u8[8192]{0}', space=vmem, size = 0x2000, scoped, tag = 'input window, operand 6, single buffered']
    #allocation14 [shape = 's32[1]{0}', space=sflag, size = 0x4, scoped, tag = 'scoped memory for tpu_custom_call.1']
    #allocation15 [shape = 'u8[8192]{0}', space=vmem, size = 0x2000, scoped, tag = 'input window, operand 7, single buffered']
    #allocation16 [shape = 'u8[16384]{0}', space=vmem, size = 0x4000, scoped, tag = 'output window, operand 0, single buffered']
    %13 = vsyncpa [#allocation5], 0
    %14 = vsyncpa [#allocation8], 0
    %15 = vsyncpa [#allocation11], 0
    %16 = vsyncpa [#allocation14], 0
    %17 = vsyncpa [#allocation6], 0
    // Predicated region
    $region2: #{tpu_custom_call.1} parent=1 // pred_check
      _
    $region3: #{tpu_custom_call.1} parent=1 // pred_check_branch
      %19 = sbr.rel (0) target = $region5
    $region4: #{tpu_custom_call.1} parent=1 // pred_region
      %s21 = ssub.s32 512, 512
      %22 = vsyncadd [#allocation5], %s21
      %s23 = sshll.u32 [#allocation4], 4
      %s24 = int_to_ptr.vmem [resolvable:$true] %s23
      %29 = dma.hbm_to_vmem [thread:$0]  %s0, 512, %s24, [#allocation5], 128, 128, 8
    $region5: #{tpu_custom_call.1} parent=1 // pred_fallthru
      _
    // Predicated region
    $region6: #{tpu_custom_call.1} parent=1 // pred_check
      _
    $region7: #{tpu_custom_call.1} parent=1 // pred_check_branch
      %31 = sbr.rel (0) target = $region9
    $region8: #{tpu_custom_call.1} parent=1 // pred_region
      %s33 = ssub.s32 512, 512
      %34 = vsyncadd [#allocation8], %s33
      %s35 = sshll.u32 [#allocation7], 4
      %s36 = int_to_ptr.vmem [resolvable:$true] %s35
      %41 = dma.hbm_to_vmem [thread:$0]  %s1, 512, %s36, [#allocation8], 128, 128, 8
    $region9: #{tpu_custom_call.1} parent=1 // pred_fallthru
      _
    // Predicated region
    $region10: #{tpu_custom_call.1} parent=1 // pred_check
      _
    $region11: #{tpu_custom_call.1} parent=1 // pred_check_branch
      %43 = sbr.rel (0) target = $region13
    $region12: #{tpu_custom_call.1} parent=1 // pred_region
      %s45 = ssub.s32 512, 512
      %46 = vsyncadd [#allocation8], %s45
      %s47 = sshll.u32 [#allocation9], 4
      %s48 = int_to_ptr.vmem [resolvable:$true] %s47
      %53 = dma.hbm_to_vmem [thread:$0]  %s2, 512, %s48, [#allocation8], 128, 128, 8
    $region13: #{tpu_custom_call.1} parent=1 // pred_fallthru
      _
    // Predicated region
    $region14: #{tpu_custom_call.1} parent=1 // pred_check
      _
    $region15: #{tpu_custom_call.1} parent=1 // pred_check_branch
      %55 = sbr.rel (0) target = $region17
    $region16: #{tpu_custom_call.1} parent=1 // pred_region
      %s57 = ssub.s32 512, 512
      %58 = vsyncadd [#allocation11], %s57
      %s59 = sshll.u32 [#allocation10], 4
      %s60 = int_to_ptr.vmem [resolvable:$true] %s59
      %65 = dma.hbm_to_vmem [thread:$0]  %s3, 512, %s60, [#allocation11], 128, 128, 8
    $region17: #{tpu_custom_call.1} parent=1 // pred_fallthru
      _
    // Predicated region
    $region18: #{tpu_custom_call.1} parent=1 // pred_check
      _
    $region19: #{tpu_custom_call.1} parent=1 // pred_check_branch
      %67 = sbr.rel (0) target = $region21
    $region20: #{tpu_custom_call.1} parent=1 // pred_region
      %s69 = ssub.s32 256, 256
      %70 = vsyncadd [#allocation11], %s69
      %s71 = sshll.u32 [#allocation12], 4
      %s72 = int_to_ptr.vmem [resolvable:$true] %s71
      %77 = dma.hbm_to_vmem [thread:$0]  %s4, 256, %s72, [#allocation11], 128, 128, 8
    $region21: #{tpu_custom_call.1} parent=1 // pred_fallthru
      _
    // Predicated region
    $region22: #{tpu_custom_call.1} parent=1 // pred_check
      _
    $region23: #{tpu_custom_call.1} parent=1 // pred_check_branch
      %79 = sbr.rel (0) target = $region25
    $region24: #{tpu_custom_call.1} parent=1 // pred_region
      _
    $region25: #{tpu_custom_call.1} parent=1 // pred_fallthru
      _
    // Predicated region
    $region26: #{tpu_custom_call.1} parent=1 // pred_check
      _
    $region27: #{tpu_custom_call.1} parent=1 // pred_check_branch
      %81 = sbr.rel (0) target = $region29
    $region28: #{tpu_custom_call.1} parent=1 // pred_region
      %s83 = ssub.s32 256, 256
      %84 = vsyncadd [#allocation14], %s83
      %s85 = sshll.u32 [#allocation13], 4
      %s86 = int_to_ptr.vmem [resolvable:$true] %s85
      %91 = dma.hbm_to_vmem [thread:$0]  %s6, 256, %s86, [#allocation14], 128, 128, 8
    $region29: #{tpu_custom_call.1} parent=1 // pred_fallthru
      _
    // Predicated region
    $region30: #{tpu_custom_call.1} parent=1 // pred_check
      _
    $region31: #{tpu_custom_call.1} parent=1 // pred_check_branch
      %93 = sbr.rel (0) target = $region33
    $region32: #{tpu_custom_call.1} parent=1 // pred_region
      %s95 = ssub.s32 256, 256
      %96 = vsyncadd [#allocation14], %s95
      %s97 = sshll.u32 [#allocation15], 4
      %s98 = int_to_ptr.vmem [resolvable:$true] %s97
      %103 = dma.hbm_to_vmem [thread:$0]  %s7, 256, %s98, [#allocation14], 128, 128, 8
    $region33: #{tpu_custom_call.1} parent=1 // pred_fallthru
      _
    // Predicated region
    $region34: #{tpu_custom_call.1} parent=1 // pred_check
      _
    $region35: #{tpu_custom_call.1} parent=1 // pred_check_branch
      %105 = sbr.rel (0) target = $region37
    $region36: #{tpu_custom_call.1} parent=1 // pred_region
      %106 = dma.done [#allocation5], 512
    $region37: #{tpu_custom_call.1} parent=1 // pred_fallthru
      _
    // Predicated region
    $region38: #{tpu_custom_call.1} parent=1 // pred_check
      _
    $region39: #{tpu_custom_call.1} parent=1 // pred_check_branch
      %108 = sbr.rel (0) target = $region41
    $region40: #{tpu_custom_call.1} parent=1 // pred_region
      %109 = dma.done [#allocation8], 512
    $region41: #{tpu_custom_call.1} parent=1 // pred_fallthru
      _
    // Predicated region
    $region42: #{tpu_custom_call.1} parent=1 // pred_check
      _
    $region43: #{tpu_custom_call.1} parent=1 // pred_check_branch
      %111 = sbr.rel (0) target = $region45
    $region44: #{tpu_custom_call.1} parent=1 // pred_region
      %112 = dma.done [#allocation8], 512
    $region45: #{tpu_custom_call.1} parent=1 // pred_fallthru
      _
    // Predicated region
    $region46: #{tpu_custom_call.1} parent=1 // pred_check
      _
    $region47: #{tpu_custom_call.1} parent=1 // pred_check_branch
      %114 = sbr.rel (0) target = $region49
    $region48: #{tpu_custom_call.1} parent=1 // pred_region
      %115 = dma.done [#allocation11], 512
    $region49: #{tpu_custom_call.1} parent=1 // pred_fallthru
      _
    // Predicated region
    $region50: #{tpu_custom_call.1} parent=1 // pred_check
      _
    $region51: #{tpu_custom_call.1} parent=1 // pred_check_branch
      %117 = sbr.rel (0) target = $region53
    $region52: #{tpu_custom_call.1} parent=1 // pred_region
      %118 = dma.done [#allocation11], 256
    $region53: #{tpu_custom_call.1} parent=1 // pred_fallthru
      _
    // Predicated region
    $region54: #{tpu_custom_call.1} parent=1 // pred_check
      _
    $region55: #{tpu_custom_call.1} parent=1 // pred_check_branch
      %120 = sbr.rel (0) target = $region57
    $region56: #{tpu_custom_call.1} parent=1 // pred_region
      %121 = dma.done [#allocation14], 256
    $region57: #{tpu_custom_call.1} parent=1 // pred_fallthru
      _
    // Predicated region
    $region58: #{tpu_custom_call.1} parent=1 // pred_check
      _
    $region59: #{tpu_custom_call.1} parent=1 // pred_check_branch
      %123 = sbr.rel (0) target = $region61
    $region60: #{tpu_custom_call.1} parent=1 // pred_region
      %124 = dma.done [#allocation14], 256
    $region61: #{tpu_custom_call.1} parent=1 // pred_fallthru
      _
    %v125 = vld [vmem:[#allocation12] sm:$0xff]
    %v126 = vld [vmem:[#allocation12 + $0x8] sm:$0xff]
    %v127 = vld [vmem:[%s5] sm:$0xff]
    %v128 = vld [vmem:[%s5 + $0x8] sm:$0xff]
    %v129 = vld [vmem:[#allocation13] sm:$0xff]
    %v130 = vld [vmem:[#allocation13 + $0x8] sm:$0xff]
    %v131 = vld [vmem:[#allocation15] sm:$0xff]
    %v132 = vld [vmem:[#allocation15 + $0x8] sm:$0xff]
    %v133 = vld [vmem:[#allocation4] sm:$0xff]
    %v134 = vld [vmem:[#allocation4 + $0x8] sm:$0xff]
    %v135 = vld [vmem:[#allocation4 + $0x10] sm:$0xff]
    %v136 = vld [vmem:[#allocation4 + $0x18] sm:$0xff]
    %vm137 = vcmask 130048
    %v139 = vsel %vm137, %v133, 0
    %v142 = vsel %vm137, %v134, 0
    %v145 = vsel %vm137, %v135, 0
    %v148 = vsel %vm137, %v136, 0
    %150 = vmatprep.subr.mxu0 0.0
    %151 = vmatpush1.msra.mxu0 %v129
    %152 = vmatprep.subr.mxu0 0.0
    %153 = vmatpush1.msra.mxu0 %v130
    %154 = vmatprep.subr.mxu0 0.0
    %155 = vmatpush1.msra.mxu0 0.0
    %156 = vmatprep.subr.mxu0 0.0
    %157 = vmatpush1.msra.mxu0 0.0
    %158 = vmatprep.subr.mxu0 0.0
    %159 = vmatpush1.msra.mxu0 0.0
    %160 = vmatprep.subr.mxu0 0.0
    %161 = vmatpush1.msra.mxu0 0.0
    %162 = vmatprep.subr.mxu0 0.0
    %163 = vmatpush1.msra.mxu0 0.0
    %164 = vmatprep.subr.mxu0 0.0
    %165 = vmatpush1.msra.mxu0 0.0
    %166 = vmatprep.subr.mxu0 0.0
    %167 = vmatpush1.msra.mxu0 0.0
    %168 = vmatprep.subr.mxu0 0.0
    %169 = vmatpush1.msra.mxu0 0.0
    %170 = vmatprep.subr.mxu0 0.0
    %171 = vmatpush1.msra.mxu0 0.0
    %172 = vmatprep.subr.mxu0 0.0
    %173 = vmatpush1.msra.mxu0 0.0
    %174 = vmatprep.subr.mxu0 0.0
    %175 = vmatpush1.msra.mxu0 0.0
    %176 = vmatprep.subr.mxu0 0.0
    %177 = vmatpush1.msra.mxu0 0.0
    %178 = vmatprep.subr.mxu0 0.0
    %179 = vmatpush1.msra.mxu0 0.0
    %180 = vmatprep.subr.mxu0 0.0
    %181 = vmatpush1.msra.mxu0 0.0
    %182 = vmatprep.subr.mxu0 0.0
    %183 = vmatpush1.msra.mxu0 0.0
    %184 = vmatprep.subr.mxu0 0.0
    %185 = vmatpush1.msra.mxu0 0.0
    %186 = vmatprep.subr.mxu0 0.0
    %187 = vmatpush1.msra.mxu0 0.0
    %188 = vmatprep.subr.mxu0 0.0
    %189 = vmatpush1.msra.mxu0 0.0
    %190 = vmatprep.subr.mxu0 0.0
    %191 = vmatpush1.msra.mxu0 0.0
    %192 = vmatprep.subr.mxu0 0.0
    %193 = vmatpush1.msra.mxu0 0.0
    %194 = vmatprep.subr.mxu0 0.0
    %195 = vmatpush1.msra.mxu0 0.0
    %196 = vmatprep.subr.mxu0 0.0
    %197 = vmatpush1.msra.mxu0 0.0
    %198 = vmatprep.subr.mxu0 0.0
    %199 = vmatpush1.msra.mxu0 0.0
    %200 = vmatprep.subr.mxu0 0.0
    %201 = vmatpush1.msra.mxu0 0.0
    %202 = vmatprep.subr.mxu0 0.0
    %203 = vmatpush1.msra.mxu0 0.0
    %204 = vmatprep.subr.mxu0 0.0
    %205 = vmatpush1.msra.mxu0 0.0
    %206 = vmatprep.subr.mxu0 0.0
    %207 = vmatpush1.msra.mxu0 0.0
    %208 = vmatprep.subr.mxu0 0.0
    %209 = vmatpush1.msra.mxu0 0.0
    %210 = vmatprep.subr.mxu0 0.0
    %211 = vmatpush1.msra.mxu0 0.0
    %212 = vmatprep.subr.mxu0 0.0
    %213 = vmatpush1.msra.mxu0 0.0
    %214 = vmatprep.mubr.f32.mxu0 0.0
    %215 = vmatmul.mubr.f32.gmra.mrb[0].mxu0 %v139
    %v216 = vpop.f32.mrb[0].mxu0
    %v217 = vadd.f32 0.0, %v216
    %v218 = vpop.f32.mrb[0].mxu0
    %219 = vmatprep.mubr.f32.mxu0 0.0
    %220 = vmatmul.mubr.f32.gmra.mrb[0].mxu0 %v142
    %v221 = vpop.f32.mrb[0].mxu0
    %v222 = vadd.f32 0.0, %v221
    %v223 = vpop.f32.mrb[0].mxu0
    %224 = vmatprep.mubr.f32.mxu0 0.0
    %225 = vmatmul.mubr.f32.gmra.mrb[0].mxu0 %v145
    %v226 = vpop.f32.mrb[0].mxu0
    %v227 = vadd.f32 0.0, %v226
    %v228 = vpop.f32.mrb[0].mxu0
    %229 = vmatprep.mubr.f32.mxu0 0.0
    %230 = vmatmul.mubr.f32.gmra.mrb[0].mxu0 %v148
    %v231 = vpop.f32.mrb[0].mxu0
    %v232 = vadd.f32 0.0, %v231
    %v233 = vpop.f32.mrb[0].mxu0
    %234 = vdwg.mxu0
    %235 = vmatprep.subr.mxu0 0.0
    %236 = vmatpush1.msra.mxu0 %v131
    %237 = vmatprep.subr.mxu0 0.0
    %238 = vmatpush1.msra.mxu0 %v132
    %239 = vmatprep.subr.mxu0 0.0
    %240 = vmatpush1.msra.mxu0 0.0
    %241 = vmatprep.subr.mxu0 0.0
    %242 = vmatpush1.msra.mxu0 0.0
    %243 = vmatprep.subr.mxu0 0.0
    %244 = vmatpush1.msra.mxu0 0.0
    %245 = vmatprep.subr.mxu0 0.0
    %246 = vmatpush1.msra.mxu0 0.0
    %247 = vmatprep.subr.mxu0 0.0
    %248 = vmatpush1.msra.mxu0 0.0
    %249 = vmatprep.subr.mxu0 0.0
    %250 = vmatpush1.msra.mxu0 0.0
    %251 = vmatprep.subr.mxu0 0.0
    %252 = vmatpush1.msra.mxu0 0.0
    %253 = vmatprep.subr.mxu0 0.0
    %254 = vmatpush1.msra.mxu0 0.0
    %255 = vmatprep.subr.mxu0 0.0
    %256 = vmatpush1.msra.mxu0 0.0
    %257 = vmatprep.subr.mxu0 0.0
    %258 = vmatpush1.msra.mxu0 0.0
    %259 = vmatprep.subr.mxu0 0.0
    %260 = vmatpush1.msra.mxu0 0.0
    %261 = vmatprep.subr.mxu0 0.0
    %262 = vmatpush1.msra.mxu0 0.0
    %263 = vmatprep.subr.mxu0 0.0
    %264 = vmatpush1.msra.mxu0 0.0
    %265 = vmatprep.subr.mxu0 0.0
    %266 = vmatpush1.msra.mxu0 0.0
    %267 = vmatprep.subr.mxu0 0.0
    %268 = vmatpush1.msra.mxu0 0.0
    %269 = vmatprep.subr.mxu0 0.0
    %270 = vmatpush1.msra.mxu0 0.0
    %271 = vmatprep.subr.mxu0 0.0
    %272 = vmatpush1.msra.mxu0 0.0
    %273 = vmatprep.subr.mxu0 0.0
    %274 = vmatpush1.msra.mxu0 0.0
    %275 = vmatprep.subr.mxu0 0.0
    %276 = vmatpush1.msra.mxu0 0.0
    %277 = vmatprep.subr.mxu0 0.0
    %278 = vmatpush1.msra.mxu0 0.0
    %279 = vmatprep.subr.mxu0 0.0
    %280 = vmatpush1.msra.mxu0 0.0
    %281 = vmatprep.subr.mxu0 0.0
    %282 = vmatpush1.msra.mxu0 0.0
    %283 = vmatprep.subr.mxu0 0.0
    %284 = vmatpush1.msra.mxu0 0.0
    %285 = vmatprep.subr.mxu0 0.0
    %286 = vmatpush1.msra.mxu0 0.0
    %287 = vmatprep.subr.mxu0 0.0
    %288 = vmatpush1.msra.mxu0 0.0
    %289 = vmatprep.subr.mxu0 0.0
    %290 = vmatpush1.msra.mxu0 0.0
    %291 = vmatprep.subr.mxu0 0.0
    %292 = vmatpush1.msra.mxu0 0.0
    %293 = vmatprep.subr.mxu0 0.0
    %294 = vmatpush1.msra.mxu0 0.0
    %295 = vmatprep.subr.mxu0 0.0
    %296 = vmatpush1.msra.mxu0 0.0
    %297 = vmatprep.subr.mxu0 0.0
    %298 = vmatpush1.msra.mxu0 0.0
    %299 = vmatprep.mubr.f32.mxu0 0.0
    %300 = vmatmul.mubr.f32.gmra.mrb[0].mxu0 %v139
    %v301 = vpop.f32.mrb[0].mxu0
    %v302 = vadd.f32 0.0, %v301
    %v303 = vpop.f32.mrb[0].mxu0
    %304 = vmatprep.mubr.f32.mxu0 0.0
    %305 = vmatmul.mubr.f32.gmra.mrb[0].mxu0 %v142
    %v306 = vpop.f32.mrb[0].mxu0
    %v307 = vadd.f32 0.0, %v306
    %v308 = vpop.f32.mrb[0].mxu0
    %309 = vmatprep.mubr.f32.mxu0 0.0
    %310 = vmatmul.mubr.f32.gmra.mrb[0].mxu0 %v145
    %v311 = vpop.f32.mrb[0].mxu0
    %v312 = vadd.f32 0.0, %v311
    %v313 = vpop.f32.mrb[0].mxu0
    %314 = vmatprep.mubr.f32.mxu0 0.0
    %315 = vmatmul.mubr.f32.gmra.mrb[0].mxu0 %v148
    %v316 = vpop.f32.mrb[0].mxu0
    %v317 = vadd.f32 0.0, %v316
    %v318 = vpop.f32.mrb[0].mxu0
    %319 = vdwg.mxu0
    %v321 = vsel %vm137, %v125, 0
    %v324 = vsel %vm137, %v126, 0
    %326 = vmatprep.subr.mxu0 0.0
    %327 = vmatpush1.msra.mxu0 %v217
    %328 = vmatprep.subr.mxu0 0.0
    %329 = vmatpush1.msra.mxu0 %v222
    %330 = vmatprep.subr.mxu0 0.0
    %331 = vmatpush1.msra.mxu0 0.0
    %332 = vmatprep.subr.mxu0 0.0
    %333 = vmatpush1.msra.mxu0 0.0
    %334 = vmatprep.subr.mxu0 0.0
    %335 = vmatpush1.msra.mxu0 0.0
    %336 = vmatprep.subr.mxu0 0.0
    %337 = vmatpush1.msra.mxu0 0.0
    %338 = vmatprep.subr.mxu0 0.0
    %339 = vmatpush1.msra.mxu0 0.0
    %340 = vmatprep.subr.mxu0 0.0
    %341 = vmatpush1.msra.mxu0 0.0
    %342 = vmatprep.subr.mxu0 0.0
    %343 = vmatpush1.msra.mxu0 0.0
    %344 = vmatprep.subr.mxu0 0.0
    %345 = vmatpush1.msra.mxu0 0.0
    %346 = vmatprep.subr.mxu0 0.0
    %347 = vmatpush1.msra.mxu0 0.0
    %348 = vmatprep.subr.mxu0 0.0
    %349 = vmatpush1.msra.mxu0 0.0
    %350 = vmatprep.subr.mxu0 0.0
    %351 = vmatpush1.msra.mxu0 0.0
    %352 = vmatprep.subr.mxu0 0.0
    %353 = vmatpush1.msra.mxu0 0.0
    %354 = vmatprep.subr.mxu0 0.0
    %355 = vmatpush1.msra.mxu0 0.0
    %356 = vmatprep.subr.mxu0 0.0
    %357 = vmatpush1.msra.mxu0 0.0
    %358 = vmatprep.subr.mxu0 0.0
    %359 = vmatpush1.msra.mxu0 0.0
    %360 = vmatprep.subr.mxu0 0.0
    %361 = vmatpush1.msra.mxu0 0.0
    %362 = vmatprep.subr.mxu0 0.0
    %363 = vmatpush1.msra.mxu0 0.0
    %364 = vmatprep.subr.mxu0 0.0
    %365 = vmatpush1.msra.mxu0 0.0
    %366 = vmatprep.subr.mxu0 0.0
    %367 = vmatpush1.msra.mxu0 0.0
    %368 = vmatprep.subr.mxu0 0.0
    %369 = vmatpush1.msra.mxu0 0.0
    %370 = vmatprep.subr.mxu0 0.0
    %371 = vmatpush1.msra.mxu0 0.0
    %372 = vmatprep.subr.mxu0 0.0
    %373 = vmatpush1.msra.mxu0 0.0
    %374 = vmatprep.subr.mxu0 0.0
    %375 = vmatpush1.msra.mxu0 0.0
    %376 = vmatprep.subr.mxu0 0.0
    %377 = vmatpush1.msra.mxu0 0.0
    %378 = vmatprep.subr.mxu0 0.0
    %379 = vmatpush1.msra.mxu0 0.0
    %380 = vmatprep.subr.mxu0 0.0
    %381 = vmatpush1.msra.mxu0 0.0
    %382 = vmatprep.subr.mxu0 0.0
    %383 = vmatpush1.msra.mxu0 0.0
    %384 = vmatprep.subr.mxu0 0.0
    %385 = vmatpush1.msra.mxu0 0.0
    %386 = vmatprep.subr.mxu0 0.0
    %387 = vmatpush1.msra.mxu0 0.0
    %388 = vmatprep.subr.mxu0 0.0
    %389 = vmatpush1.msra.mxu0 0.0
    %390 = vmatprep.mubr.f32.mxu0 0.0
    %391 = vmatmul.mubr.f32.gmra.mrb[0].mxu0 %v321
    %v392 = vpop.f32.mrb[0].mxu0
    %v393 = vadd.f32 0.0, %v392
    %v394 = vpop.f32.mrb[0].mxu0
    %395 = vmatprep.mubr.f32.mxu0 0.0
    %396 = vmatmul.mubr.f32.gmra.mrb[0].mxu0 %v324
    %v397 = vpop.f32.mrb[0].mxu0
    %v398 = vadd.f32 0.0, %v397
    %v399 = vpop.f32.mrb[0].mxu0
    %400 = vdwg.mxu0
    %v402 = vsel %vm137, %v127, 0
    %v405 = vsel %vm137, %v128, 0
    %407 = vmatprep.subr.mxu0 0.0
    %408 = vmatpush1.msra.mxu0 %v302
    %409 = vmatprep.subr.mxu0 0.0
    %410 = vmatpush1.msra.mxu0 %v307
    %411 = vmatprep.subr.mxu0 0.0
    %412 = vmatpush1.msra.mxu0 0.0
    %413 = vmatprep.subr.mxu0 0.0
    %414 = vmatpush1.msra.mxu0 0.0
    %415 = vmatprep.subr.mxu0 0.0
    %416 = vmatpush1.msra.mxu0 0.0
    %417 = vmatprep.subr.mxu0 0.0
    %418 = vmatpush1.msra.mxu0 0.0
    %419 = vmatprep.subr.mxu0 0.0
    %420 = vmatpush1.msra.mxu0 0.0
    %421 = vmatprep.subr.mxu0 0.0
    %422 = vmatpush1.msra.mxu0 0.0
    %423 = vmatprep.subr.mxu0 0.0
    %424 = vmatpush1.msra.mxu0 0.0
    %425 = vmatprep.subr.mxu0 0.0
    %426 = vmatpush1.msra.mxu0 0.0
    %427 = vmatprep.subr.mxu0 0.0
    %428 = vmatpush1.msra.mxu0 0.0
    %429 = vmatprep.subr.mxu0 0.0
    %430 = vmatpush1.msra.mxu0 0.0
    %431 = vmatprep.subr.mxu0 0.0
    %432 = vmatpush1.msra.mxu0 0.0
    %433 = vmatprep.subr.mxu0 0.0
    %434 = vmatpush1.msra.mxu0 0.0
    %435 = vmatprep.subr.mxu0 0.0
    %436 = vmatpush1.msra.mxu0 0.0
    %437 = vmatprep.subr.mxu0 0.0
    %438 = vmatpush1.msra.mxu0 0.0
    %439 = vmatprep.subr.mxu0 0.0
    %440 = vmatpush1.msra.mxu0 0.0
    %441 = vmatprep.subr.mxu0 0.0
    %442 = vmatpush1.msra.mxu0 0.0
    %443 = vmatprep.subr.mxu0 0.0
    %444 = vmatpush1.msra.mxu0 0.0
    %445 = vmatprep.subr.mxu0 0.0
    %446 = vmatpush1.msra.mxu0 0.0
    %447 = vmatprep.subr.mxu0 0.0
    %448 = vmatpush1.msra.mxu0 0.0
    %449 = vmatprep.subr.mxu0 0.0
    %450 = vmatpush1.msra.mxu0 0.0
    %451 = vmatprep.subr.mxu0 0.0
    %452 = vmatpush1.msra.mxu0 0.0
    %453 = vmatprep.subr.mxu0 0.0
    %454 = vmatpush1.msra.mxu0 0.0
    %455 = vmatprep.subr.mxu0 0.0
    %456 = vmatpush1.msra.mxu0 0.0
    %457 = vmatprep.subr.mxu0 0.0
    %458 = vmatpush1.msra.mxu0 0.0
    %459 = vmatprep.subr.mxu0 0.0
    %460 = vmatpush1.msra.mxu0 0.0
    %461 = vmatprep.subr.mxu0 0.0
    %462 = vmatpush1.msra.mxu0 0.0
    %463 = vmatprep.subr.mxu0 0.0
    %464 = vmatpush1.msra.mxu0 0.0
    %465 = vmatprep.subr.mxu0 0.0
    %466 = vmatpush1.msra.mxu0 0.0
    %467 = vmatprep.subr.mxu0 0.0
    %468 = vmatpush1.msra.mxu0 0.0
    %469 = vmatprep.subr.mxu0 0.0
    %470 = vmatpush1.msra.mxu0 0.0
    %471 = vmatprep.mubr.f32.mxu0 0.0
    %472 = vmatmul.mubr.f32.gmra.mrb[0].mxu0 %v402
    %v473 = vpop.f32.mrb[0].mxu0
    %v474 = vadd.f32 0.0, %v473
    %v475 = vpop.f32.mrb[0].mxu0
    %476 = vmatprep.mubr.f32.mxu0 0.0
    %477 = vmatmul.mubr.f32.gmra.mrb[0].mxu0 %v405
    %v478 = vpop.f32.mrb[0].mxu0
    %v479 = vadd.f32 0.0, %v478
    %v480 = vpop.f32.mrb[0].mxu0
    %481 = vdwg.mxu0
    %v482 = vsub.f32 %v393, %v474
    %v483 = vsub.f32 %v398, %v479
    %484 = vmatprep.subr.mxu0 0.0
    %485 = vmatpush1.msra.mxu0 %v217
    %486 = vmatprep.subr.mxu0 0.0
    %487 = vmatpush1.msra.mxu0 %v222
    %488 = vmatprep.subr.mxu0 0.0
    %489 = vmatpush1.msra.mxu0 0.0
    %490 = vmatprep.subr.mxu0 0.0
    %491 = vmatpush1.msra.mxu0 0.0
    %492 = vmatprep.subr.mxu0 0.0
    %493 = vmatpush1.msra.mxu0 0.0
    %494 = vmatprep.subr.mxu0 0.0
    %495 = vmatpush1.msra.mxu0 0.0
    %496 = vmatprep.subr.mxu0 0.0
    %497 = vmatpush1.msra.mxu0 0.0
    %498 = vmatprep.subr.mxu0 0.0
    %499 = vmatpush1.msra.mxu0 0.0
    %500 = vmatprep.subr.mxu0 0.0
    %501 = vmatpush1.msra.mxu0 0.0
    %502 = vmatprep.subr.mxu0 0.0
    %503 = vmatpush1.msra.mxu0 0.0
    %504 = vmatprep.subr.mxu0 0.0
    %505 = vmatpush1.msra.mxu0 0.0
    %506 = vmatprep.subr.mxu0 0.0
    %507 = vmatpush1.msra.mxu0 0.0
    %508 = vmatprep.subr.mxu0 0.0
    %509 = vmatpush1.msra.mxu0 0.0
    %510 = vmatprep.subr.mxu0 0.0
    %511 = vmatpush1.msra.mxu0 0.0
    %512 = vmatprep.subr.mxu0 0.0
    %513 = vmatpush1.msra.mxu0 0.0
    %514 = vmatprep.subr.mxu0 0.0
    %515 = vmatpush1.msra.mxu0 0.0
    %516 = vmatprep.subr.mxu0 0.0
    %517 = vmatpush1.msra.mxu0 0.0
    %518 = vmatprep.subr.mxu0 0.0
    %519 = vmatpush1.msra.mxu0 0.0
    %520 = vmatprep.subr.mxu0 0.0
    %521 = vmatpush1.msra.mxu0 0.0
    %522 = vmatprep.subr.mxu0 0.0
    %523 = vmatpush1.msra.mxu0 0.0
    %524 = vmatprep.subr.mxu0 0.0
    %525 = vmatpush1.msra.mxu0 0.0
    %526 = vmatprep.subr.mxu0 0.0
    %527 = vmatpush1.msra.mxu0 0.0
    %528 = vmatprep.subr.mxu0 0.0
    %529 = vmatpush1.msra.mxu0 0.0
    %530 = vmatprep.subr.mxu0 0.0
    %531 = vmatpush1.msra.mxu0 0.0
    %532 = vmatprep.subr.mxu0 0.0
    %533 = vmatpush1.msra.mxu0 0.0
    %534 = vmatprep.subr.mxu0 0.0
    %535 = vmatpush1.msra.mxu0 0.0
    %536 = vmatprep.subr.mxu0 0.0
    %537 = vmatpush1.msra.mxu0 0.0
    %538 = vmatprep.subr.mxu0 0.0
    %539 = vmatpush1.msra.mxu0 0.0
    %540 = vmatprep.subr.mxu0 0.0
    %541 = vmatpush1.msra.mxu0 0.0
    %542 = vmatprep.subr.mxu0 0.0
    %543 = vmatpush1.msra.mxu0 0.0
    %544 = vmatprep.subr.mxu0 0.0
    %545 = vmatpush1.msra.mxu0 0.0
    %546 = vmatprep.subr.mxu0 0.0
    %547 = vmatpush1.msra.mxu0 0.0
    %548 = vmatprep.mubr.f32.mxu0 0.0
    %549 = vmatmul.mubr.f32.gmra.mrb[0].mxu0 %v402
    %v550 = vpop.f32.mrb[0].mxu0
    %v551 = vadd.f32 0.0, %v550
    %v552 = vpop.f32.mrb[0].mxu0
    %553 = vmatprep.mubr.f32.mxu0 0.0
    %554 = vmatmul.mubr.f32.gmra.mrb[0].mxu0 %v405
    %v555 = vpop.f32.mrb[0].mxu0
    %v556 = vadd.f32 0.0, %v555
    %v557 = vpop.f32.mrb[0].mxu0
    %558 = vdwg.mxu0
    %559 = vmatprep.subr.mxu0 0.0
    %560 = vmatpush1.msra.mxu0 %v302
    %561 = vmatprep.subr.mxu0 0.0
    %562 = vmatpush1.msra.mxu0 %v307
    %563 = vmatprep.subr.mxu0 0.0
    %564 = vmatpush1.msra.mxu0 0.0
    %565 = vmatprep.subr.mxu0 0.0
    %566 = vmatpush1.msra.mxu0 0.0
    %567 = vmatprep.subr.mxu0 0.0
    %568 = vmatpush1.msra.mxu0 0.0
    %569 = vmatprep.subr.mxu0 0.0
    %570 = vmatpush1.msra.mxu0 0.0
    %571 = vmatprep.subr.mxu0 0.0
    %572 = vmatpush1.msra.mxu0 0.0
    %573 = vmatprep.subr.mxu0 0.0
    %574 = vmatpush1.msra.mxu0 0.0
    %575 = vmatprep.subr.mxu0 0.0
    %576 = vmatpush1.msra.mxu0 0.0
    %577 = vmatprep.subr.mxu0 0.0
    %578 = vmatpush1.msra.mxu0 0.0
    %579 = vmatprep.subr.mxu0 0.0
    %580 = vmatpush1.msra.mxu0 0.0
    %581 = vmatprep.subr.mxu0 0.0
    %582 = vmatpush1.msra.mxu0 0.0
    %583 = vmatprep.subr.mxu0 0.0
    %584 = vmatpush1.msra.mxu0 0.0
    %585 = vmatprep.subr.mxu0 0.0
    %586 = vmatpush1.msra.mxu0 0.0
    %587 = vmatprep.subr.mxu0 0.0
    %588 = vmatpush1.msra.mxu0 0.0
    %589 = vmatprep.subr.mxu0 0.0
    %590 = vmatpush1.msra.mxu0 0.0
    %591 = vmatprep.subr.mxu0 0.0
    %592 = vmatpush1.msra.mxu0 0.0
    %593 = vmatprep.subr.mxu0 0.0
    %594 = vmatpush1.msra.mxu0 0.0
    %595 = vmatprep.subr.mxu0 0.0
    %596 = vmatpush1.msra.mxu0 0.0
    %597 = vmatprep.subr.mxu0 0.0
    %598 = vmatpush1.msra.mxu0 0.0
    %599 = vmatprep.subr.mxu0 0.0
    %600 = vmatpush1.msra.mxu0 0.0
    %601 = vmatprep.subr.mxu0 0.0
    %602 = vmatpush1.msra.mxu0 0.0
    %603 = vmatprep.subr.mxu0 0.0
    %604 = vmatpush1.msra.mxu0 0.0
    %605 = vmatprep.subr.mxu0 0.0
    %606 = vmatpush1.msra.mxu0 0.0
    %607 = vmatprep.subr.mxu0 0.0
    %608 = vmatpush1.msra.mxu0 0.0
    %609 = vmatprep.subr.mxu0 0.0
    %610 = vmatpush1.msra.mxu0 0.0
    %611 = vmatprep.subr.mxu0 0.0
    %612 = vmatpush1.msra.mxu0 0.0
    %613 = vmatprep.subr.mxu0 0.0
    %614 = vmatpush1.msra.mxu0 0.0
    %615 = vmatprep.subr.mxu0 0.0
    %616 = vmatpush1.msra.mxu0 0.0
    %617 = vmatprep.subr.mxu0 0.0
    %618 = vmatpush1.msra.mxu0 0.0
    %619 = vmatprep.subr.mxu0 0.0
    %620 = vmatpush1.msra.mxu0 0.0
    %621 = vmatprep.subr.mxu0 0.0
    %622 = vmatpush1.msra.mxu0 0.0
    %623 = vmatprep.mubr.f32.mxu0 0.0
    %624 = vmatmul.mubr.f32.gmra.mrb[0].mxu0 %v321
    %v625 = vpop.f32.mrb[0].mxu0
    %v626 = vadd.f32 %v551, %v625
    %v627 = vpop.f32.mrb[0].mxu0
    %628 = vmatprep.mubr.f32.mxu0 0.0
    %629 = vmatmul.mubr.f32.gmra.mrb[0].mxu0 %v324
    %v630 = vpop.f32.mrb[0].mxu0
    %v631 = vadd.f32 %v556, %v630
    %v632 = vpop.f32.mrb[0].mxu0
    %633 = vdwg.mxu0
    %v634 = vld [vmem:[#allocation10] sm:$0xff]
    %v635 = vld [vmem:[#allocation10 + $0x8] sm:$0xff]
    %v636 = vld [vmem:[#allocation7] sm:$0xff]
    %v637 = vld [vmem:[#allocation7 + $0x8] sm:$0xff]
    %v638 = vmul.f32 %v634, %v482
    %v639 = vmul.f32 %v635, %v483
    %v640 = vadd.f32 %v636, %v638
    %v641 = vadd.f32 %v637, %v639
    %v642 = vld [vmem:[#allocation9] sm:$0xff]
    %v643 = vld [vmem:[#allocation9 + $0x8] sm:$0xff]
    %v644 = vmul.f32 %v634, %v626
    %v645 = vmul.f32 %v635, %v631
    %v646 = vadd.f32 %v642, %v644
    %v647 = vadd.f32 %v643, %v645
    %648 = vmatprep.subr.mxu0 0.0
    %649 = vmatpush1.msra.mxu0 %v646
    %650 = vmatprep.subr.mxu0 0.0
    %651 = vmatpush1.msra.mxu0 %v647
    %652 = vmatprep.subr.mxu0 0.0
    %653 = vmatpush1.msra.mxu0 0.0
    %654 = vmatprep.subr.mxu0 0.0
    %655 = vmatpush1.msra.mxu0 0.0
    %656 = vmatprep.subr.mxu0 0.0
    %657 = vmatpush1.msra.mxu0 0.0
    %658 = vmatprep.subr.mxu0 0.0
    %659 = vmatpush1.msra.mxu0 0.0
    %660 = vmatprep.subr.mxu0 0.0
    %661 = vmatpush1.msra.mxu0 0.0
    %662 = vmatprep.subr.mxu0 0.0
    %663 = vmatpush1.msra.mxu0 0.0
    %664 = vmatprep.subr.mxu0 0.0
    %665 = vmatpush1.msra.mxu0 0.0
    %666 = vmatprep.subr.mxu0 0.0
    %667 = vmatpush1.msra.mxu0 0.0
    %668 = vmatprep.subr.mxu0 0.0
    %669 = vmatpush1.msra.mxu0 0.0
    %670 = vmatprep.subr.mxu0 0.0
    %671 = vmatpush1.msra.mxu0 0.0
    %672 = vmatprep.subr.mxu0 0.0
    %673 = vmatpush1.msra.mxu0 0.0
    %674 = vmatprep.subr.mxu0 0.0
    %675 = vmatpush1.msra.mxu0 0.0
    %676 = vmatprep.subr.mxu0 0.0
    %677 = vmatpush1.msra.mxu0 0.0
    %678 = vmatprep.subr.mxu0 0.0
    %679 = vmatpush1.msra.mxu0 0.0
    %680 = vmatprep.subr.mxu0 0.0
    %681 = vmatpush1.msra.mxu0 0.0
    %682 = vmatprep.subr.mxu0 0.0
    %683 = vmatpush1.msra.mxu0 0.0
    %684 = vmatprep.subr.mxu0 0.0
    %685 = vmatpush1.msra.mxu0 0.0
    %686 = vmatprep.subr.mxu0 0.0
    %687 = vmatpush1.msra.mxu0 0.0
    %688 = vmatprep.subr.mxu0 0.0
    %689 = vmatpush1.msra.mxu0 0.0
    %690 = vmatprep.subr.mxu0 0.0
    %691 = vmatpush1.msra.mxu0 0.0
    %692 = vmatprep.subr.mxu0 0.0
    %693 = vmatpush1.msra.mxu0 0.0
    %694 = vmatprep.subr.mxu0 0.0
    %695 = vmatpush1.msra.mxu0 0.0
    %696 = vmatprep.subr.mxu0 0.0
    %697 = vmatpush1.msra.mxu0 0.0
    %698 = vmatprep.subr.mxu0 0.0
    %699 = vmatpush1.msra.mxu0 0.0
    %700 = vmatprep.subr.mxu0 0.0
    %701 = vmatpush1.msra.mxu0 0.0
    %702 = vmatprep.subr.mxu0 0.0
    %703 = vmatpush1.msra.mxu0 0.0
    %704 = vmatprep.subr.mxu0 0.0
    %705 = vmatpush1.msra.mxu0 0.0
    %706 = vmatprep.subr.mxu0 0.0
    %707 = vmatpush1.msra.mxu0 0.0
    %708 = vmatprep.subr.mxu0 0.0
    %709 = vmatpush1.msra.mxu0 0.0
    %710 = vmatprep.subr.mxu0 0.0
    %711 = vmatpush1.msra.mxu0 0.0
    %712 = vmatprep.mubr.f32.mxu0 0.0
    %713 = vmatmul.mubr.f32.gmra.mrb[0].mxu0 %v402
    %v714 = vpop.f32.mrb[0].mxu0
    %v715 = vadd.f32 0.0, %v714
    %v716 = vpop.f32.mrb[0].mxu0
    %717 = vmatprep.mubr.f32.mxu0 0.0
    %718 = vmatmul.mubr.f32.gmra.mrb[0].mxu0 %v405
    %v719 = vpop.f32.mrb[0].mxu0
    %v720 = vadd.f32 0.0, %v719
    %v721 = vpop.f32.mrb[0].mxu0
    %722 = vdwg.mxu0
    %723 = vmatprep.subr.mxu0 0.0
    %724 = vmatpush1.msra.mxu0 %v640
    %725 = vmatprep.subr.mxu0 0.0
    %726 = vmatpush1.msra.mxu0 %v641
    %727 = vmatprep.subr.mxu0 0.0
    %728 = vmatpush1.msra.mxu0 0.0
    %729 = vmatprep.subr.mxu0 0.0
    %730 = vmatpush1.msra.mxu0 0.0
    %731 = vmatprep.subr.mxu0 0.0
    %732 = vmatpush1.msra.mxu0 0.0
    %733 = vmatprep.subr.mxu0 0.0
    %734 = vmatpush1.msra.mxu0 0.0
    %735 = vmatprep.subr.mxu0 0.0
    %736 = vmatpush1.msra.mxu0 0.0
    %737 = vmatprep.subr.mxu0 0.0
    %738 = vmatpush1.msra.mxu0 0.0
    %739 = vmatprep.subr.mxu0 0.0
    %740 = vmatpush1.msra.mxu0 0.0
    %741 = vmatprep.subr.mxu0 0.0
    %742 = vmatpush1.msra.mxu0 0.0
    %743 = vmatprep.subr.mxu0 0.0
    %744 = vmatpush1.msra.mxu0 0.0
    %745 = vmatprep.subr.mxu0 0.0
    %746 = vmatpush1.msra.mxu0 0.0
    %747 = vmatprep.subr.mxu0 0.0
    %748 = vmatpush1.msra.mxu0 0.0
    %749 = vmatprep.subr.mxu0 0.0
    %750 = vmatpush1.msra.mxu0 0.0
    %751 = vmatprep.subr.mxu0 0.0
    %752 = vmatpush1.msra.mxu0 0.0
    %753 = vmatprep.subr.mxu0 0.0
    %754 = vmatpush1.msra.mxu0 0.0
    %755 = vmatprep.subr.mxu0 0.0
    %756 = vmatpush1.msra.mxu0 0.0
    %757 = vmatprep.subr.mxu0 0.0
    %758 = vmatpush1.msra.mxu0 0.0
    %759 = vmatprep.subr.mxu0 0.0
    %760 = vmatpush1.msra.mxu0 0.0
    %761 = vmatprep.subr.mxu0 0.0
    %762 = vmatpush1.msra.mxu0 0.0
    %763 = vmatprep.subr.mxu0 0.0
    %764 = vmatpush1.msra.mxu0 0.0
    %765 = vmatprep.subr.mxu0 0.0
    %766 = vmatpush1.msra.mxu0 0.0
    %767 = vmatprep.subr.mxu0 0.0
    %768 = vmatpush1.msra.mxu0 0.0
    %769 = vmatprep.subr.mxu0 0.0
    %770 = vmatpush1.msra.mxu0 0.0
    %771 = vmatprep.subr.mxu0 0.0
    %772 = vmatpush1.msra.mxu0 0.0
    %773 = vmatprep.subr.mxu0 0.0
    %774 = vmatpush1.msra.mxu0 0.0
    %775 = vmatprep.subr.mxu0 0.0
    %776 = vmatpush1.msra.mxu0 0.0
    %777 = vmatprep.subr.mxu0 0.0
    %778 = vmatpush1.msra.mxu0 0.0
    %779 = vmatprep.subr.mxu0 0.0
    %780 = vmatpush1.msra.mxu0 0.0
    %781 = vmatprep.subr.mxu0 0.0
    %782 = vmatpush1.msra.mxu0 0.0
    %783 = vmatprep.subr.mxu0 0.0
    %784 = vmatpush1.msra.mxu0 0.0
    %785 = vmatprep.subr.mxu0 0.0
    %786 = vmatpush1.msra.mxu0 0.0
    %787 = vmatprep.mubr.f32.mxu0 0.0
    %788 = vmatmul.mubr.f32.gmra.mrb[0].mxu0 %v321
    %v789 = vpop.f32.mrb[0].mxu0
    %v790 = vadd.f32 %v715, %v789
    %v791 = vpop.f32.mrb[0].mxu0
    %792 = vmatprep.mubr.f32.mxu0 0.0
    %793 = vmatmul.mubr.f32.gmra.mrb[0].mxu0 %v324
    %v794 = vpop.f32.mrb[0].mxu0
    %v795 = vadd.f32 %v720, %v794
    %v796 = vpop.f32.mrb[0].mxu0
    %797 = vdwg.mxu0
    %798 = vst.msk [vmem:[#allocation2] sm:$0xff] %vm137, %v790
    %799 = vst.msk [vmem:[#allocation2 + $0x8] sm:$0xff] %vm137, %v795
    %800 = vmatprep.subr.mxu0 0.0
    %801 = vmatpush1.msra.mxu0 %v646
    %802 = vmatprep.subr.mxu0 0.0
    %803 = vmatpush1.msra.mxu0 %v647
    %804 = vmatprep.subr.mxu0 0.0
    %805 = vmatpush1.msra.mxu0 0.0
    %806 = vmatprep.subr.mxu0 0.0
    %807 = vmatpush1.msra.mxu0 0.0
    %808 = vmatprep.subr.mxu0 0.0
    %809 = vmatpush1.msra.mxu0 0.0
    %810 = vmatprep.subr.mxu0 0.0
    %811 = vmatpush1.msra.mxu0 0.0
    %812 = vmatprep.subr.mxu0 0.0
    %813 = vmatpush1.msra.mxu0 0.0
    %814 = vmatprep.subr.mxu0 0.0
    %815 = vmatpush1.msra.mxu0 0.0
    %816 = vmatprep.subr.mxu0 0.0
    %817 = vmatpush1.msra.mxu0 0.0
    %818 = vmatprep.subr.mxu0 0.0
    %819 = vmatpush1.msra.mxu0 0.0
    %820 = vmatprep.subr.mxu0 0.0
    %821 = vmatpush1.msra.mxu0 0.0
    %822 = vmatprep.subr.mxu0 0.0
    %823 = vmatpush1.msra.mxu0 0.0
    %824 = vmatprep.subr.mxu0 0.0
    %825 = vmatpush1.msra.mxu0 0.0
    %826 = vmatprep.subr.mxu0 0.0
    %827 = vmatpush1.msra.mxu0 0.0
    %828 = vmatprep.subr.mxu0 0.0
    %829 = vmatpush1.msra.mxu0 0.0
    %830 = vmatprep.subr.mxu0 0.0
    %831 = vmatpush1.msra.mxu0 0.0
    %832 = vmatprep.subr.mxu0 0.0
    %833 = vmatpush1.msra.mxu0 0.0
    %834 = vmatprep.subr.mxu0 0.0
    %835 = vmatpush1.msra.mxu0 0.0
    %836 = vmatprep.subr.mxu0 0.0
    %837 = vmatpush1.msra.mxu0 0.0
    %838 = vmatprep.subr.mxu0 0.0
    %839 = vmatpush1.msra.mxu0 0.0
    %840 = vmatprep.subr.mxu0 0.0
    %841 = vmatpush1.msra.mxu0 0.0
    %842 = vmatprep.subr.mxu0 0.0
    %843 = vmatpush1.msra.mxu0 0.0
    %844 = vmatprep.subr.mxu0 0.0
    %845 = vmatpush1.msra.mxu0 0.0
    %846 = vmatprep.subr.mxu0 0.0
    %847 = vmatpush1.msra.mxu0 0.0
    %848 = vmatprep.subr.mxu0 0.0
    %849 = vmatpush1.msra.mxu0 0.0
    %850 = vmatprep.subr.mxu0 0.0
    %851 = vmatpush1.msra.mxu0 0.0
    %852 = vmatprep.subr.mxu0 0.0
    %853 = vmatpush1.msra.mxu0 0.0
    %854 = vmatprep.subr.mxu0 0.0
    %855 = vmatpush1.msra.mxu0 0.0
    %856 = vmatprep.subr.mxu0 0.0
    %857 = vmatpush1.msra.mxu0 0.0
    %858 = vmatprep.subr.mxu0 0.0
    %859 = vmatpush1.msra.mxu0 0.0
    %860 = vmatprep.subr.mxu0 0.0
    %861 = vmatpush1.msra.mxu0 0.0
    %862 = vmatprep.subr.mxu0 0.0
    %863 = vmatpush1.msra.mxu0 0.0
    %864 = vmatprep.mubr.f32.mxu0 0.0
    %865 = vmatmul.mubr.f32.gmra.mrb[0].mxu0 %v321
    %v866 = vpop.f32.mrb[0].mxu0
    %v867 = vadd.f32 0.0, %v866
    %v868 = vpop.f32.mrb[0].mxu0
    %869 = vmatprep.mubr.f32.mxu0 0.0
    %870 = vmatmul.mubr.f32.gmra.mrb[0].mxu0 %v324
    %v871 = vpop.f32.mrb[0].mxu0
    %v872 = vadd.f32 0.0, %v871
    %v873 = vpop.f32.mrb[0].mxu0
    %874 = vdwg.mxu0
    %875 = vmatprep.subr.mxu0 0.0
    %876 = vmatpush1.msra.mxu0 %v640
    %877 = vmatprep.subr.mxu0 0.0
    %878 = vmatpush1.msra.mxu0 %v641
    %879 = vmatprep.subr.mxu0 0.0
    %880 = vmatpush1.msra.mxu0 0.0
    %881 = vmatprep.subr.mxu0 0.0
    %882 = vmatpush1.msra.mxu0 0.0
    %883 = vmatprep.subr.mxu0 0.0
    %884 = vmatpush1.msra.mxu0 0.0
    %885 = vmatprep.subr.mxu0 0.0
    %886 = vmatpush1.msra.mxu0 0.0
    %887 = vmatprep.subr.mxu0 0.0
    %888 = vmatpush1.msra.mxu0 0.0
    %889 = vmatprep.subr.mxu0 0.0
    %890 = vmatpush1.msra.mxu0 0.0
    %891 = vmatprep.subr.mxu0 0.0
    %892 = vmatpush1.msra.mxu0 0.0
    %893 = vmatprep.subr.mxu0 0.0
    %894 = vmatpush1.msra.mxu0 0.0
    %895 = vmatprep.subr.mxu0 0.0
    %896 = vmatpush1.msra.mxu0 0.0
    %897 = vmatprep.subr.mxu0 0.0
    %898 = vmatpush1.msra.mxu0 0.0
    %899 = vmatprep.subr.mxu0 0.0
    %900 = vmatpush1.msra.mxu0 0.0
    %901 = vmatprep.subr.mxu0 0.0
    %902 = vmatpush1.msra.mxu0 0.0
    %903 = vmatprep.subr.mxu0 0.0
    %904 = vmatpush1.msra.mxu0 0.0
    %905 = vmatprep.subr.mxu0 0.0
    %906 = vmatpush1.msra.mxu0 0.0
    %907 = vmatprep.subr.mxu0 0.0
    %908 = vmatpush1.msra.mxu0 0.0
    %909 = vmatprep.subr.mxu0 0.0
    %910 = vmatpush1.msra.mxu0 0.0
    %911 = vmatprep.subr.mxu0 0.0
    %912 = vmatpush1.msra.mxu0 0.0
    %913 = vmatprep.subr.mxu0 0.0
    %914 = vmatpush1.msra.mxu0 0.0
    %915 = vmatprep.subr.mxu0 0.0
    %916 = vmatpush1.msra.mxu0 0.0
    %917 = vmatprep.subr.mxu0 0.0
    %918 = vmatpush1.msra.mxu0 0.0
    %919 = vmatprep.subr.mxu0 0.0
    %920 = vmatpush1.msra.mxu0 0.0
    %921 = vmatprep.subr.mxu0 0.0
    %922 = vmatpush1.msra.mxu0 0.0
    %923 = vmatprep.subr.mxu0 0.0
    %924 = vmatpush1.msra.mxu0 0.0
    %925 = vmatprep.subr.mxu0 0.0
    %926 = vmatpush1.msra.mxu0 0.0
    %927 = vmatprep.subr.mxu0 0.0
    %928 = vmatpush1.msra.mxu0 0.0
    %929 = vmatprep.subr.mxu0 0.0
    %930 = vmatpush1.msra.mxu0 0.0
    %931 = vmatprep.subr.mxu0 0.0
    %932 = vmatpush1.msra.mxu0 0.0
    %933 = vmatprep.subr.mxu0 0.0
    %934 = vmatpush1.msra.mxu0 0.0
    %935 = vmatprep.subr.mxu0 0.0
    %936 = vmatpush1.msra.mxu0 0.0
    %937 = vmatprep.subr.mxu0 0.0
    %938 = vmatpush1.msra.mxu0 0.0
    %939 = vmatprep.mubr.f32.mxu0 0.0
    %940 = vmatmul.mubr.f32.gmra.mrb[0].mxu0 %v402
    %v941 = vpop.f32.mrb[0].mxu0
    %v942 = vadd.f32 0.0, %v941
    %v943 = vpop.f32.mrb[0].mxu0
    %944 = vmatprep.mubr.f32.mxu0 0.0
    %945 = vmatmul.mubr.f32.gmra.mrb[0].mxu0 %v405
    %v946 = vpop.f32.mrb[0].mxu0
    %v947 = vadd.f32 0.0, %v946
    %v948 = vpop.f32.mrb[0].mxu0
    %949 = vdwg.mxu0
    %v950 = vsub.f32 %v867, %v942
    %v951 = vsub.f32 %v872, %v947
    %952 = vst.msk [vmem:[#allocation3] sm:$0xff] %vm137, %v950
    %953 = vst.msk [vmem:[#allocation3 + $0x8] sm:$0xff] %vm137, %v951
    %954 = vmatprep.subr.mxu0 0.0
    %955 = vmatpush1.msra.mxu0 %v227
    %956 = vmatprep.subr.mxu0 0.0
    %957 = vmatpush1.msra.mxu0 %v232
    %958 = vmatprep.subr.mxu0 0.0
    %959 = vmatpush1.msra.mxu0 0.0
    %960 = vmatprep.subr.mxu0 0.0
    %961 = vmatpush1.msra.mxu0 0.0
    %962 = vmatprep.subr.mxu0 0.0
    %963 = vmatpush1.msra.mxu0 0.0
    %964 = vmatprep.subr.mxu0 0.0
    %965 = vmatpush1.msra.mxu0 0.0
    %966 = vmatprep.subr.mxu0 0.0
    %967 = vmatpush1.msra.mxu0 0.0
    %968 = vmatprep.subr.mxu0 0.0
    %969 = vmatpush1.msra.mxu0 0.0
    %970 = vmatprep.subr.mxu0 0.0
    %971 = vmatpush1.msra.mxu0 0.0
    %972 = vmatprep.subr.mxu0 0.0
    %973 = vmatpush1.msra.mxu0 0.0
    %974 = vmatprep.subr.mxu0 0.0
    %975 = vmatpush1.msra.mxu0 0.0
    %976 = vmatprep.subr.mxu0 0.0
    %977 = vmatpush1.msra.mxu0 0.0
    %978 = vmatprep.subr.mxu0 0.0
    %979 = vmatpush1.msra.mxu0 0.0
    %980 = vmatprep.subr.mxu0 0.0
    %981 = vmatpush1.msra.mxu0 0.0
    %982 = vmatprep.subr.mxu0 0.0
    %983 = vmatpush1.msra.mxu0 0.0
    %984 = vmatprep.subr.mxu0 0.0
    %985 = vmatpush1.msra.mxu0 0.0
    %986 = vmatprep.subr.mxu0 0.0
    %987 = vmatpush1.msra.mxu0 0.0
    %988 = vmatprep.subr.mxu0 0.0
    %989 = vmatpush1.msra.mxu0 0.0
    %990 = vmatprep.subr.mxu0 0.0
    %991 = vmatpush1.msra.mxu0 0.0
    %992 = vmatprep.subr.mxu0 0.0
    %993 = vmatpush1.msra.mxu0 0.0
    %994 = vmatprep.subr.mxu0 0.0
    %995 = vmatpush1.msra.mxu0 0.0
    %996 = vmatprep.subr.mxu0 0.0
    %997 = vmatpush1.msra.mxu0 0.0
    %998 = vmatprep.subr.mxu0 0.0
    %999 = vmatpush1.msra.mxu0 0.0
    %1000 = vmatprep.subr.mxu0 0.0
    %1001 = vmatpush1.msra.mxu0 0.0
    %1002 = vmatprep.subr.mxu0 0.0
    %1003 = vmatpush1.msra.mxu0 0.0
    %1004 = vmatprep.subr.mxu0 0.0
    %1005 = vmatpush1.msra.mxu0 0.0
    %1006 = vmatprep.subr.mxu0 0.0
    %1007 = vmatpush1.msra.mxu0 0.0
    %1008 = vmatprep.subr.mxu0 0.0
    %1009 = vmatpush1.msra.mxu0 0.0
    %1010 = vmatprep.subr.mxu0 0.0
    %1011 = vmatpush1.msra.mxu0 0.0
    %1012 = vmatprep.subr.mxu0 0.0
    %1013 = vmatpush1.msra.mxu0 0.0
    %1014 = vmatprep.subr.mxu0 0.0
    %1015 = vmatpush1.msra.mxu0 0.0
    %1016 = vmatprep.subr.mxu0 0.0
    %1017 = vmatpush1.msra.mxu0 0.0
    %1018 = vmatprep.mubr.f32.mxu0 0.0
    %1019 = vmatmul.mubr.f32.gmra.mrb[0].mxu0 %v321
    %v1020 = vpop.f32.mrb[0].mxu0
    %v1021 = vadd.f32 0.0, %v1020
    %v1022 = vpop.f32.mrb[0].mxu0
    %1023 = vmatprep.mubr.f32.mxu0 0.0
    %1024 = vmatmul.mubr.f32.gmra.mrb[0].mxu0 %v324
    %v1025 = vpop.f32.mrb[0].mxu0
    %v1026 = vadd.f32 0.0, %v1025
    %v1027 = vpop.f32.mrb[0].mxu0
    %1028 = vdwg.mxu0
    %1029 = vmatprep.subr.mxu0 0.0
    %1030 = vmatpush1.msra.mxu0 %v312
    %1031 = vmatprep.subr.mxu0 0.0
    %1032 = vmatpush1.msra.mxu0 %v317
    %1033 = vmatprep.subr.mxu0 0.0
    %1034 = vmatpush1.msra.mxu0 0.0
    %1035 = vmatprep.subr.mxu0 0.0
    %1036 = vmatpush1.msra.mxu0 0.0
    %1037 = vmatprep.subr.mxu0 0.0
    %1038 = vmatpush1.msra.mxu0 0.0
    %1039 = vmatprep.subr.mxu0 0.0
    %1040 = vmatpush1.msra.mxu0 0.0
    %1041 = vmatprep.subr.mxu0 0.0
    %1042 = vmatpush1.msra.mxu0 0.0
    %1043 = vmatprep.subr.mxu0 0.0
    %1044 = vmatpush1.msra.mxu0 0.0
    %1045 = vmatprep.subr.mxu0 0.0
    %1046 = vmatpush1.msra.mxu0 0.0
    %1047 = vmatprep.subr.mxu0 0.0
    %1048 = vmatpush1.msra.mxu0 0.0
    %1049 = vmatprep.subr.mxu0 0.0
    %1050 = vmatpush1.msra.mxu0 0.0
    %1051 = vmatprep.subr.mxu0 0.0
    %1052 = vmatpush1.msra.mxu0 0.0
    %1053 = vmatprep.subr.mxu0 0.0
    %1054 = vmatpush1.msra.mxu0 0.0
    %1055 = vmatprep.subr.mxu0 0.0
    %1056 = vmatpush1.msra.mxu0 0.0
    %1057 = vmatprep.subr.mxu0 0.0
    %1058 = vmatpush1.msra.mxu0 0.0
    %1059 = vmatprep.subr.mxu0 0.0
    %1060 = vmatpush1.msra.mxu0 0.0
    %1061 = vmatprep.subr.mxu0 0.0
    %1062 = vmatpush1.msra.mxu0 0.0
    %1063 = vmatprep.subr.mxu0 0.0
    %1064 = vmatpush1.msra.mxu0 0.0
    %1065 = vmatprep.subr.mxu0 0.0
    %1066 = vmatpush1.msra.mxu0 0.0
    %1067 = vmatprep.subr.mxu0 0.0
    %1068 = vmatpush1.msra.mxu0 0.0
    %1069 = vmatprep.subr.mxu0 0.0
    %1070 = vmatpush1.msra.mxu0 0.0
    %1071 = vmatprep.subr.mxu0 0.0
    %1072 = vmatpush1.msra.mxu0 0.0
    %1073 = vmatprep.subr.mxu0 0.0
    %1074 = vmatpush1.msra.mxu0 0.0
    %1075 = vmatprep.subr.mxu0 0.0
    %1076 = vmatpush1.msra.mxu0 0.0
    %1077 = vmatprep.subr.mxu0 0.0
    %1078 = vmatpush1.msra.mxu0 0.0
    %1079 = vmatprep.subr.mxu0 0.0
    %1080 = vmatpush1.msra.mxu0 0.0
    %1081 = vmatprep.subr.mxu0 0.0
    %1082 = vmatpush1.msra.mxu0 0.0
    %1083 = vmatprep.subr.mxu0 0.0
    %1084 = vmatpush1.msra.mxu0 0.0
    %1085 = vmatprep.subr.mxu0 0.0
    %1086 = vmatpush1.msra.mxu0 0.0
    %1087 = vmatprep.subr.mxu0 0.0
    %1088 = vmatpush1.msra.mxu0 0.0
    %1089 = vmatprep.subr.mxu0 0.0
    %1090 = vmatpush1.msra.mxu0 0.0
    %1091 = vmatprep.subr.mxu0 0.0
    %1092 = vmatpush1.msra.mxu0 0.0
    %1093 = vmatprep.mubr.f32.mxu0 0.0
    %1094 = vmatmul.mubr.f32.gmra.mrb[0].mxu0 %v402
    %v1095 = vpop.f32.mrb[0].mxu0
    %v1096 = vadd.f32 0.0, %v1095
    %v1097 = vpop.f32.mrb[0].mxu0
    %1098 = vmatprep.mubr.f32.mxu0 0.0
    %1099 = vmatmul.mubr.f32.gmra.mrb[0].mxu0 %v405
    %v1100 = vpop.f32.mrb[0].mxu0
    %v1101 = vadd.f32 0.0, %v1100
    %v1102 = vpop.f32.mrb[0].mxu0
    %1103 = vdwg.mxu0
    %v1104 = vsub.f32 %v1021, %v1096
    %v1105 = vsub.f32 %v1026, %v1101
    %1106 = vmatprep.subr.mxu0 0.0
    %1107 = vmatpush1.msra.mxu0 %v227
    %1108 = vmatprep.subr.mxu0 0.0
    %1109 = vmatpush1.msra.mxu0 %v232
    %1110 = vmatprep.subr.mxu0 0.0
    %1111 = vmatpush1.msra.mxu0 0.0
    %1112 = vmatprep.subr.mxu0 0.0
    %1113 = vmatpush1.msra.mxu0 0.0
    %1114 = vmatprep.subr.mxu0 0.0
    %1115 = vmatpush1.msra.mxu0 0.0
    %1116 = vmatprep.subr.mxu0 0.0
    %1117 = vmatpush1.msra.mxu0 0.0
    %1118 = vmatprep.subr.mxu0 0.0
    %1119 = vmatpush1.msra.mxu0 0.0
    %1120 = vmatprep.subr.mxu0 0.0
    %1121 = vmatpush1.msra.mxu0 0.0
    %1122 = vmatprep.subr.mxu0 0.0
    %1123 = vmatpush1.msra.mxu0 0.0
    %1124 = vmatprep.subr.mxu0 0.0
    %1125 = vmatpush1.msra.mxu0 0.0
    %1126 = vmatprep.subr.mxu0 0.0
    %1127 = vmatpush1.msra.mxu0 0.0
    %1128 = vmatprep.subr.mxu0 0.0
    %1129 = vmatpush1.msra.mxu0 0.0
    %1130 = vmatprep.subr.mxu0 0.0
    %1131 = vmatpush1.msra.mxu0 0.0
    %1132 = vmatprep.subr.mxu0 0.0
    %1133 = vmatpush1.msra.mxu0 0.0
    %1134 = vmatprep.subr.mxu0 0.0
    %1135 = vmatpush1.msra.mxu0 0.0
    %1136 = vmatprep.subr.mxu0 0.0
    %1137 = vmatpush1.msra.mxu0 0.0
    %1138 = vmatprep.subr.mxu0 0.0
    %1139 = vmatpush1.msra.mxu0 0.0
    %1140 = vmatprep.subr.mxu0 0.0
    %1141 = vmatpush1.msra.mxu0 0.0
    %1142 = vmatprep.subr.mxu0 0.0
    %1143 = vmatpush1.msra.mxu0 0.0
    %1144 = vmatprep.subr.mxu0 0.0
    %1145 = vmatpush1.msra.mxu0 0.0
    %1146 = vmatprep.subr.mxu0 0.0
    %1147 = vmatpush1.msra.mxu0 0.0
    %1148 = vmatprep.subr.mxu0 0.0
    %1149 = vmatpush1.msra.mxu0 0.0
    %1150 = vmatprep.subr.mxu0 0.0
    %1151 = vmatpush1.msra.mxu0 0.0
    %1152 = vmatprep.subr.mxu0 0.0
    %1153 = vmatpush1.msra.mxu0 0.0
    %1154 = vmatprep.subr.mxu0 0.0
    %1155 = vmatpush1.msra.mxu0 0.0
    %1156 = vmatprep.subr.mxu0 0.0
    %1157 = vmatpush1.msra.mxu0 0.0
    %1158 = vmatprep.subr.mxu0 0.0
    %1159 = vmatpush1.msra.mxu0 0.0
    %1160 = vmatprep.subr.mxu0 0.0
    %1161 = vmatpush1.msra.mxu0 0.0
    %1162 = vmatprep.subr.mxu0 0.0
    %1163 = vmatpush1.msra.mxu0 0.0
    %1164 = vmatprep.subr.mxu0 0.0
    %1165 = vmatpush1.msra.mxu0 0.0
    %1166 = vmatprep.subr.mxu0 0.0
    %1167 = vmatpush1.msra.mxu0 0.0
    %1168 = vmatprep.subr.mxu0 0.0
    %1169 = vmatpush1.msra.mxu0 0.0
    %1170 = vmatprep.mubr.f32.mxu0 0.0
    %1171 = vmatmul.mubr.f32.gmra.mrb[0].mxu0 %v402
    %v1172 = vpop.f32.mrb[0].mxu0
    %v1173 = vadd.f32 0.0, %v1172
    %v1174 = vpop.f32.mrb[0].mxu0
    %1175 = vmatprep.mubr.f32.mxu0 0.0
    %1176 = vmatmul.mubr.f32.gmra.mrb[0].mxu0 %v405
    %v1177 = vpop.f32.mrb[0].mxu0
    %v1178 = vadd.f32 0.0, %v1177
    %v1179 = vpop.f32.mrb[0].mxu0
    %1180 = vdwg.mxu0
    %1181 = vmatprep.subr.mxu0 0.0
    %1182 = vmatpush1.msra.mxu0 %v312
    %1183 = vmatprep.subr.mxu0 0.0
    %1184 = vmatpush1.msra.mxu0 %v317
    %1185 = vmatprep.subr.mxu0 0.0
    %1186 = vmatpush1.msra.mxu0 0.0
    %1187 = vmatprep.subr.mxu0 0.0
    %1188 = vmatpush1.msra.mxu0 0.0
    %1189 = vmatprep.subr.mxu0 0.0
    %1190 = vmatpush1.msra.mxu0 0.0
    %1191 = vmatprep.subr.mxu0 0.0
    %1192 = vmatpush1.msra.mxu0 0.0
    %1193 = vmatprep.subr.mxu0 0.0
    %1194 = vmatpush1.msra.mxu0 0.0
    %1195 = vmatprep.subr.mxu0 0.0
    %1196 = vmatpush1.msra.mxu0 0.0
    %1197 = vmatprep.subr.mxu0 0.0
    %1198 = vmatpush1.msra.mxu0 0.0
    %1199 = vmatprep.subr.mxu0 0.0
    %1200 = vmatpush1.msra.mxu0 0.0
    %1201 = vmatprep.subr.mxu0 0.0
    %1202 = vmatpush1.msra.mxu0 0.0
    %1203 = vmatprep.subr.mxu0 0.0
    %1204 = vmatpush1.msra.mxu0 0.0
    %1205 = vmatprep.subr.mxu0 0.0
    %1206 = vmatpush1.msra.mxu0 0.0
    %1207 = vmatprep.subr.mxu0 0.0
    %1208 = vmatpush1.msra.mxu0 0.0
    %1209 = vmatprep.subr.mxu0 0.0
    %1210 = vmatpush1.msra.mxu0 0.0
    %1211 = vmatprep.subr.mxu0 0.0
    %1212 = vmatpush1.msra.mxu0 0.0
    %1213 = vmatprep.subr.mxu0 0.0
    %1214 = vmatpush1.msra.mxu0 0.0
    %1215 = vmatprep.subr.mxu0 0.0
    %1216 = vmatpush1.msra.mxu0 0.0
    %1217 = vmatprep.subr.mxu0 0.0
    %1218 = vmatpush1.msra.mxu0 0.0
    %1219 = vmatprep.subr.mxu0 0.0
    %1220 = vmatpush1.msra.mxu0 0.0
    %1221 = vmatprep.subr.mxu0 0.0
    %1222 = vmatpush1.msra.mxu0 0.0
    %1223 = vmatprep.subr.mxu0 0.0
    %1224 = vmatpush1.msra.mxu0 0.0
    %1225 = vmatprep.subr.mxu0 0.0
    %1226 = vmatpush1.msra.mxu0 0.0
    %1227 = vmatprep.subr.mxu0 0.0
    %1228 = vmatpush1.msra.mxu0 0.0
    %1229 = vmatprep.subr.mxu0 0.0
    %1230 = vmatpush1.msra.mxu0 0.0
    %1231 = vmatprep.subr.mxu0 0.0
    %1232 = vmatpush1.msra.mxu0 0.0
    %1233 = vmatprep.subr.mxu0 0.0
    %1234 = vmatpush1.msra.mxu0 0.0
    %1235 = vmatprep.subr.mxu0 0.0
    %1236 = vmatpush1.msra.mxu0 0.0
    %1237 = vmatprep.subr.mxu0 0.0
    %1238 = vmatpush1.msra.mxu0 0.0
    %1239 = vmatprep.subr.mxu0 0.0
    %1240 = vmatpush1.msra.mxu0 0.0
    %1241 = vmatprep.subr.mxu0 0.0
    %1242 = vmatpush1.msra.mxu0 0.0
    %1243 = vmatprep.subr.mxu0 0.0
    %1244 = vmatpush1.msra.mxu0 0.0
    %1245 = vmatprep.mubr.f32.mxu0 0.0
    %1246 = vmatmul.mubr.f32.gmra.mrb[0].mxu0 %v321
    %v1247 = vpop.f32.mrb[0].mxu0
    %v1248 = vadd.f32 %v1173, %v1247
    %v1249 = vpop.f32.mrb[0].mxu0
    %1250 = vmatprep.mubr.f32.mxu0 0.0
    %1251 = vmatmul.mubr.f32.gmra.mrb[0].mxu0 %v324
    %v1252 = vpop.f32.mrb[0].mxu0
    %v1253 = vadd.f32 %v1178, %v1252
    %v1254 = vpop.f32.mrb[0].mxu0
    %1255 = vdwg.mxu0
    %s1256 = scalar_lea.vmem [#allocation10], 16
    %v1257 = vld [vmem:[%s1256] sm:$0xff]
    %v1258 = vld [vmem:[%s1256 + $0x8] sm:$0xff]
    %s1259 = scalar_lea.vmem [#allocation7], 16
    %v1260 = vld [vmem:[%s1259] sm:$0xff]
    %v1261 = vld [vmem:[%s1259 + $0x8] sm:$0xff]
    %v1262 = vmul.f32 %v1257, %v1104
    %v1263 = vmul.f32 %v1258, %v1105
    %v1264 = vadd.f32 %v1260, %v1262
    %v1265 = vadd.f32 %v1261, %v1263
    %s1266 = scalar_lea.vmem [#allocation9], 16
    %v1267 = vld [vmem:[%s1266] sm:$0xff]
    %v1268 = vld [vmem:[%s1266 + $0x8] sm:$0xff]
    %v1269 = vmul.f32 %v1257, %v1248
    %v1270 = vmul.f32 %v1258, %v1253
    %v1271 = vadd.f32 %v1267, %v1269
    %v1272 = vadd.f32 %v1268, %v1270
    %1273 = vmatprep.subr.mxu0 0.0
    %1274 = vmatpush1.msra.mxu0 %v1271
    %1275 = vmatprep.subr.mxu0 0.0
    %1276 = vmatpush1.msra.mxu0 %v1272
    %1277 = vmatprep.subr.mxu0 0.0
    %1278 = vmatpush1.msra.mxu0 0.0
    %1279 = vmatprep.subr.mxu0 0.0
    %1280 = vmatpush1.msra.mxu0 0.0
    %1281 = vmatprep.subr.mxu0 0.0
    %1282 = vmatpush1.msra.mxu0 0.0
    %1283 = vmatprep.subr.mxu0 0.0
    %1284 = vmatpush1.msra.mxu0 0.0
    %1285 = vmatprep.subr.mxu0 0.0
    %1286 = vmatpush1.msra.mxu0 0.0
    %1287 = vmatprep.subr.mxu0 0.0
    %1288 = vmatpush1.msra.mxu0 0.0
    %1289 = vmatprep.subr.mxu0 0.0
    %1290 = vmatpush1.msra.mxu0 0.0
    %1291 = vmatprep.subr.mxu0 0.0
    %1292 = vmatpush1.msra.mxu0 0.0
    %1293 = vmatprep.subr.mxu0 0.0
    %1294 = vmatpush1.msra.mxu0 0.0
    %1295 = vmatprep.subr.mxu0 0.0
    %1296 = vmatpush1.msra.mxu0 0.0
    %1297 = vmatprep.subr.mxu0 0.0
    %1298 = vmatpush1.msra.mxu0 0.0
    %1299 = vmatprep.subr.mxu0 0.0
    %1300 = vmatpush1.msra.mxu0 0.0
    %1301 = vmatprep.subr.mxu0 0.0
    %1302 = vmatpush1.msra.mxu0 0.0
    %1303 = vmatprep.subr.mxu0 0.0
    %1304 = vmatpush1.msra.mxu0 0.0
    %1305 = vmatprep.subr.mxu0 0.0
    %1306 = vmatpush1.msra.mxu0 0.0
    %1307 = vmatprep.subr.mxu0 0.0
    %1308 = vmatpush1.msra.mxu0 0.0
    %1309 = vmatprep.subr.mxu0 0.0
    %1310 = vmatpush1.msra.mxu0 0.0
    %1311 = vmatprep.subr.mxu0 0.0
    %1312 = vmatpush1.msra.mxu0 0.0
    %1313 = vmatprep.subr.mxu0 0.0
    %1314 = vmatpush1.msra.mxu0 0.0
    %1315 = vmatprep.subr.mxu0 0.0
    %1316 = vmatpush1.msra.mxu0 0.0
    %1317 = vmatprep.subr.mxu0 0.0
    %1318 = vmatpush1.msra.mxu0 0.0
    %1319 = vmatprep.subr.mxu0 0.0
    %1320 = vmatpush1.msra.mxu0 0.0
    %1321 = vmatprep.subr.mxu0 0.0
    %1322 = vmatpush1.msra.mxu0 0.0
    %1323 = vmatprep.subr.mxu0 0.0
    %1324 = vmatpush1.msra.mxu0 0.0
    %1325 = vmatprep.subr.mxu0 0.0
    %1326 = vmatpush1.msra.mxu0 0.0
    %1327 = vmatprep.subr.mxu0 0.0
    %1328 = vmatpush1.msra.mxu0 0.0
    %1329 = vmatprep.subr.mxu0 0.0
    %1330 = vmatpush1.msra.mxu0 0.0
    %1331 = vmatprep.subr.mxu0 0.0
    %1332 = vmatpush1.msra.mxu0 0.0
    %1333 = vmatprep.subr.mxu0 0.0
    %1334 = vmatpush1.msra.mxu0 0.0
    %1335 = vmatprep.subr.mxu0 0.0
    %1336 = vmatpush1.msra.mxu0 0.0
    %1337 = vmatprep.mubr.f32.mxu0 0.0
    %1338 = vmatmul.mubr.f32.gmra.mrb[0].mxu0 %v402
    %v1339 = vpop.f32.mrb[0].mxu0
    %v1340 = vadd.f32 0.0, %v1339
    %v1341 = vpop.f32.mrb[0].mxu0
    %1342 = vmatprep.mubr.f32.mxu0 0.0
    %1343 = vmatmul.mubr.f32.gmra.mrb[0].mxu0 %v405
    %v1344 = vpop.f32.mrb[0].mxu0
    %v1345 = vadd.f32 0.0, %v1344
    %v1346 = vpop.f32.mrb[0].mxu0
    %1347 = vdwg.mxu0
    %1348 = vmatprep.subr.mxu0 0.0
    %1349 = vmatpush1.msra.mxu0 %v1264
    %1350 = vmatprep.subr.mxu0 0.0
    %1351 = vmatpush1.msra.mxu0 %v1265
    %1352 = vmatprep.subr.mxu0 0.0
    %1353 = vmatpush1.msra.mxu0 0.0
    %1354 = vmatprep.subr.mxu0 0.0
    %1355 = vmatpush1.msra.mxu0 0.0
    %1356 = vmatprep.subr.mxu0 0.0
    %1357 = vmatpush1.msra.mxu0 0.0
    %1358 = vmatprep.subr.mxu0 0.0
    %1359 = vmatpush1.msra.mxu0 0.0
    %1360 = vmatprep.subr.mxu0 0.0
    %1361 = vmatpush1.msra.mxu0 0.0
    %1362 = vmatprep.subr.mxu0 0.0
    %1363 = vmatpush1.msra.mxu0 0.0
    %1364 = vmatprep.subr.mxu0 0.0
    %1365 = vmatpush1.msra.mxu0 0.0
    %1366 = vmatprep.subr.mxu0 0.0
    %1367 = vmatpush1.msra.mxu0 0.0
    %1368 = vmatprep.subr.mxu0 0.0
    %1369 = vmatpush1.msra.mxu0 0.0
    %1370 = vmatprep.subr.mxu0 0.0
    %1371 = vmatpush1.msra.mxu0 0.0
    %1372 = vmatprep.subr.mxu0 0.0
    %1373 = vmatpush1.msra.mxu0 0.0
    %1374 = vmatprep.subr.mxu0 0.0
    %1375 = vmatpush1.msra.mxu0 0.0
    %1376 = vmatprep.subr.mxu0 0.0
    %1377 = vmatpush1.msra.mxu0 0.0
    %1378 = vmatprep.subr.mxu0 0.0
    %1379 = vmatpush1.msra.mxu0 0.0
    %1380 = vmatprep.subr.mxu0 0.0
    %1381 = vmatpush1.msra.mxu0 0.0
    %1382 = vmatprep.subr.mxu0 0.0
    %1383 = vmatpush1.msra.mxu0 0.0
    %1384 = vmatprep.subr.mxu0 0.0
    %1385 = vmatpush1.msra.mxu0 0.0
    %1386 = vmatprep.subr.mxu0 0.0
    %1387 = vmatpush1.msra.mxu0 0.0
    %1388 = vmatprep.subr.mxu0 0.0
    %1389 = vmatpush1.msra.mxu0 0.0
    %1390 = vmatprep.subr.mxu0 0.0
    %1391 = vmatpush1.msra.mxu0 0.0
    %1392 = vmatprep.subr.mxu0 0.0
    %1393 = vmatpush1.msra.mxu0 0.0
    %1394 = vmatprep.subr.mxu0 0.0
    %1395 = vmatpush1.msra.mxu0 0.0
    %1396 = vmatprep.subr.mxu0 0.0
    %1397 = vmatpush1.msra.mxu0 0.0
    %1398 = vmatprep.subr.mxu0 0.0
    %1399 = vmatpush1.msra.mxu0 0.0
    %1400 = vmatprep.subr.mxu0 0.0
    %1401 = vmatpush1.msra.mxu0 0.0
    %1402 = vmatprep.subr.mxu0 0.0
    %1403 = vmatpush1.msra.mxu0 0.0
    %1404 = vmatprep.subr.mxu0 0.0
    %1405 = vmatpush1.msra.mxu0 0.0
    %1406 = vmatprep.subr.mxu0 0.0
    %1407 = vmatpush1.msra.mxu0 0.0
    %1408 = vmatprep.subr.mxu0 0.0
    %1409 = vmatpush1.msra.mxu0 0.0
    %1410 = vmatprep.subr.mxu0 0.0
    %1411 = vmatpush1.msra.mxu0 0.0
    %1412 = vmatprep.mubr.f32.mxu0 0.0
    %1413 = vmatmul.mubr.f32.gmra.mrb[0].mxu0 %v321
    %v1414 = vpop.f32.mrb[0].mxu0
    %v1415 = vadd.f32 %v1340, %v1414
    %v1416 = vpop.f32.mrb[0].mxu0
    %1417 = vmatprep.mubr.f32.mxu0 0.0
    %1418 = vmatmul.mubr.f32.gmra.mrb[0].mxu0 %v324
    %v1419 = vpop.f32.mrb[0].mxu0
    %v1420 = vadd.f32 %v1345, %v1419
    %v1421 = vpop.f32.mrb[0].mxu0
    %1422 = vdwg.mxu0
    %1423 = vst.msk [vmem:[#allocation2 + $0x10] sm:$0xff] %vm137, %v1415
    %1424 = vst.msk [vmem:[#allocation2 + $0x18] sm:$0xff] %vm137, %v1420
    %1425 = vmatprep.subr.mxu0 0.0
    %1426 = vmatpush1.msra.mxu0 %v1271
    %1427 = vmatprep.subr.mxu0 0.0
    %1428 = vmatpush1.msra.mxu0 %v1272
    %1429 = vmatprep.subr.mxu0 0.0
    %1430 = vmatpush1.msra.mxu0 0.0
    %1431 = vmatprep.subr.mxu0 0.0
    %1432 = vmatpush1.msra.mxu0 0.0
    %1433 = vmatprep.subr.mxu0 0.0
    %1434 = vmatpush1.msra.mxu0 0.0
    %1435 = vmatprep.subr.mxu0 0.0
    %1436 = vmatpush1.msra.mxu0 0.0
    %1437 = vmatprep.subr.mxu0 0.0
    %1438 = vmatpush1.msra.mxu0 0.0
    %1439 = vmatprep.subr.mxu0 0.0
    %1440 = vmatpush1.msra.mxu0 0.0
    %1441 = vmatprep.subr.mxu0 0.0
    %1442 = vmatpush1.msra.mxu0 0.0
    %1443 = vmatprep.subr.mxu0 0.0
    %1444 = vmatpush1.msra.mxu0 0.0
    %1445 = vmatprep.subr.mxu0 0.0
    %1446 = vmatpush1.msra.mxu0 0.0
    %1447 = vmatprep.subr.mxu0 0.0
    %1448 = vmatpush1.msra.mxu0 0.0
    %1449 = vmatprep.subr.mxu0 0.0
    %1450 = vmatpush1.msra.mxu0 0.0
    %1451 = vmatprep.subr.mxu0 0.0
    %1452 = vmatpush1.msra.mxu0 0.0
    %1453 = vmatprep.subr.mxu0 0.0
    %1454 = vmatpush1.msra.mxu0 0.0
    %1455 = vmatprep.subr.mxu0 0.0
    %1456 = vmatpush1.msra.mxu0 0.0
    %1457 = vmatprep.subr.mxu0 0.0
    %1458 = vmatpush1.msra.mxu0 0.0
    %1459 = vmatprep.subr.mxu0 0.0
    %1460 = vmatpush1.msra.mxu0 0.0
    %1461 = vmatprep.subr.mxu0 0.0
    %1462 = vmatpush1.msra.mxu0 0.0
    %1463 = vmatprep.subr.mxu0 0.0
    %1464 = vmatpush1.msra.mxu0 0.0
    %1465 = vmatprep.subr.mxu0 0.0
    %1466 = vmatpush1.msra.mxu0 0.0
    %1467 = vmatprep.subr.mxu0 0.0
    %1468 = vmatpush1.msra.mxu0 0.0
    %1469 = vmatprep.subr.mxu0 0.0
    %1470 = vmatpush1.msra.mxu0 0.0
    %1471 = vmatprep.subr.mxu0 0.0
    %1472 = vmatpush1.msra.mxu0 0.0
    %1473 = vmatprep.subr.mxu0 0.0
    %1474 = vmatpush1.msra.mxu0 0.0
    %1475 = vmatprep.subr.mxu0 0.0
    %1476 = vmatpush1.msra.mxu0 0.0
    %1477 = vmatprep.subr.mxu0 0.0
    %1478 = vmatpush1.msra.mxu0 0.0
    %1479 = vmatprep.subr.mxu0 0.0
    %1480 = vmatpush1.msra.mxu0 0.0
    %1481 = vmatprep.subr.mxu0 0.0
    %1482 = vmatpush1.msra.mxu0 0.0
    %1483 = vmatprep.subr.mxu0 0.0
    %1484 = vmatpush1.msra.mxu0 0.0
    %1485 = vmatprep.subr.mxu0 0.0
    %1486 = vmatpush1.msra.mxu0 0.0
    %1487 = vmatprep.subr.mxu0 0.0
    %1488 = vmatpush1.msra.mxu0 0.0
    %1489 = vmatprep.mubr.f32.mxu0 0.0
    %1490 = vmatmul.mubr.f32.gmra.mrb[0].mxu0 %v321
    %v1491 = vpop.f32.mrb[0].mxu0
    %v1492 = vadd.f32 0.0, %v1491
    %v1493 = vpop.f32.mrb[0].mxu0
    %1494 = vmatprep.mubr.f32.mxu0 0.0
    %1495 = vmatmul.mubr.f32.gmra.mrb[0].mxu0 %v324
    %v1496 = vpop.f32.mrb[0].mxu0
    %v1497 = vadd.f32 0.0, %v1496
    %v1498 = vpop.f32.mrb[0].mxu0
    %1499 = vdwg.mxu0
    %1500 = vmatprep.subr.mxu0 0.0
    %1501 = vmatpush1.msra.mxu0 %v1264
    %1502 = vmatprep.subr.mxu0 0.0
    %1503 = vmatpush1.msra.mxu0 %v1265
    %1504 = vmatprep.subr.mxu0 0.0
    %1505 = vmatpush1.msra.mxu0 0.0
    %1506 = vmatprep.subr.mxu0 0.0
    %1507 = vmatpush1.msra.mxu0 0.0
    %1508 = vmatprep.subr.mxu0 0.0
    %1509 = vmatpush1.msra.mxu0 0.0
    %1510 = vmatprep.subr.mxu0 0.0
    %1511 = vmatpush1.msra.mxu0 0.0
    %1512 = vmatprep.subr.mxu0 0.0
    %1513 = vmatpush1.msra.mxu0 0.0
    %1514 = vmatprep.subr.mxu0 0.0
    %1515 = vmatpush1.msra.mxu0 0.0
    %1516 = vmatprep.subr.mxu0 0.0
    %1517 = vmatpush1.msra.mxu0 0.0
    %1518 = vmatprep.subr.mxu0 0.0
    %1519 = vmatpush1.msra.mxu0 0.0
    %1520 = vmatprep.subr.mxu0 0.0
    %1521 = vmatpush1.msra.mxu0 0.0
    %1522 = vmatprep.subr.mxu0 0.0
    %1523 = vmatpush1.msra.mxu0 0.0
    %1524 = vmatprep.subr.mxu0 0.0
    %1525 = vmatpush1.msra.mxu0 0.0
    %1526 = vmatprep.subr.mxu0 0.0
    %1527 = vmatpush1.msra.mxu0 0.0
    %1528 = vmatprep.subr.mxu0 0.0
    %1529 = vmatpush1.msra.mxu0 0.0
    %1530 = vmatprep.subr.mxu0 0.0
    %1531 = vmatpush1.msra.mxu0 0.0
    %1532 = vmatprep.subr.mxu0 0.0
    %1533 = vmatpush1.msra.mxu0 0.0
    %1534 = vmatprep.subr.mxu0 0.0
    %1535 = vmatpush1.msra.mxu0 0.0
    %1536 = vmatprep.subr.mxu0 0.0
    %1537 = vmatpush1.msra.mxu0 0.0
    %1538 = vmatprep.subr.mxu0 0.0
    %1539 = vmatpush1.msra.mxu0 0.0
    %1540 = vmatprep.subr.mxu0 0.0
    %1541 = vmatpush1.msra.mxu0 0.0
    %1542 = vmatprep.subr.mxu0 0.0
    %1543 = vmatpush1.msra.mxu0 0.0
    %1544 = vmatprep.subr.mxu0 0.0
    %1545 = vmatpush1.msra.mxu0 0.0
    %1546 = vmatprep.subr.mxu0 0.0
    %1547 = vmatpush1.msra.mxu0 0.0
    %1548 = vmatprep.subr.mxu0 0.0
    %1549 = vmatpush1.msra.mxu0 0.0
    %1550 = vmatprep.subr.mxu0 0.0
    %1551 = vmatpush1.msra.mxu0 0.0
    %1552 = vmatprep.subr.mxu0 0.0
    %1553 = vmatpush1.msra.mxu0 0.0
    %1554 = vmatprep.subr.mxu0 0.0
    %1555 = vmatpush1.msra.mxu0 0.0
    %1556 = vmatprep.subr.mxu0 0.0
    %1557 = vmatpush1.msra.mxu0 0.0
    %1558 = vmatprep.subr.mxu0 0.0
    %1559 = vmatpush1.msra.mxu0 0.0
    %1560 = vmatprep.subr.mxu0 0.0
    %1561 = vmatpush1.msra.mxu0 0.0
    %1562 = vmatprep.subr.mxu0 0.0
    %1563 = vmatpush1.msra.mxu0 0.0
    %1564 = vmatprep.mubr.f32.mxu0 0.0
    %1565 = vmatmul.mubr.f32.gmra.mrb[0].mxu0 %v402
    %v1566 = vpop.f32.mrb[0].mxu0
    %v1567 = vadd.f32 0.0, %v1566
    %v1568 = vpop.f32.mrb[0].mxu0
    %1569 = vmatprep.mubr.f32.mxu0 0.0
    %1570 = vmatmul.mubr.f32.gmra.mrb[0].mxu0 %v405
    %v1571 = vpop.f32.mrb[0].mxu0
    %v1572 = vadd.f32 0.0, %v1571
    %v1573 = vpop.f32.mrb[0].mxu0
    %1574 = vdwg.mxu0
    %v1575 = vsub.f32 %v1492, %v1567
    %v1576 = vsub.f32 %v1497, %v1572
    %1577 = vst.msk [vmem:[#allocation3 + $0x10] sm:$0xff] %vm137, %v1575
    %1578 = vst.msk [vmem:[#allocation3 + $0x18] sm:$0xff] %vm137, %v1576
    %v1579 = vld [vmem:[#allocation2] sm:$0xff]
    %v1580 = vld [vmem:[#allocation2 + $0x8] sm:$0xff]
    %v1581 = vld [vmem:[#allocation2 + $0x10] sm:$0xff]
    %v1582 = vld [vmem:[#allocation2 + $0x18] sm:$0xff]
    %v1583 = vld [vmem:[#allocation3] sm:$0xff]
    %v1584 = vld [vmem:[#allocation3 + $0x8] sm:$0xff]
    %v1585 = vld [vmem:[#allocation3 + $0x10] sm:$0xff]
    %v1586 = vld [vmem:[#allocation3 + $0x18] sm:$0xff]
    %v1588 = vsel %vm137, %v1583, 0
    %v1591 = vsel %vm137, %v1584, 0
    %v1594 = vsel %vm137, %v1585, 0
    %v1597 = vsel %vm137, %v1586, 0
    %1599 = vmatprep.subr.mxu0 0.0
    %1600 = vmatpush1.msra.mxu0 %v131
    %1601 = vmatprep.subr.mxu0 0.0
    %1602 = vmatpush1.msra.mxu0 %v132
    %1603 = vmatprep.subr.mxu0 0.0
    %1604 = vmatpush1.msra.mxu0 0.0
    %1605 = vmatprep.subr.mxu0 0.0
    %1606 = vmatpush1.msra.mxu0 0.0
    %1607 = vmatprep.subr.mxu0 0.0
    %1608 = vmatpush1.msra.mxu0 0.0
    %1609 = vmatprep.subr.mxu0 0.0
    %1610 = vmatpush1.msra.mxu0 0.0
    %1611 = vmatprep.subr.mxu0 0.0
    %1612 = vmatpush1.msra.mxu0 0.0
    %1613 = vmatprep.subr.mxu0 0.0
    %1614 = vmatpush1.msra.mxu0 0.0
    %1615 = vmatprep.subr.mxu0 0.0
    %1616 = vmatpush1.msra.mxu0 0.0
    %1617 = vmatprep.subr.mxu0 0.0
    %1618 = vmatpush1.msra.mxu0 0.0
    %1619 = vmatprep.subr.mxu0 0.0
    %1620 = vmatpush1.msra.mxu0 0.0
    %1621 = vmatprep.subr.mxu0 0.0
    %1622 = vmatpush1.msra.mxu0 0.0
    %1623 = vmatprep.subr.mxu0 0.0
    %1624 = vmatpush1.msra.mxu0 0.0
    %1625 = vmatprep.subr.mxu0 0.0
    %1626 = vmatpush1.msra.mxu0 0.0
    %1627 = vmatprep.subr.mxu0 0.0
    %1628 = vmatpush1.msra.mxu0 0.0
    %1629 = vmatprep.subr.mxu0 0.0
    %1630 = vmatpush1.msra.mxu0 0.0
    %1631 = vmatprep.subr.mxu0 0.0
    %1632 = vmatpush1.msra.mxu0 0.0
    %1633 = vmatprep.subr.mxu0 0.0
    %1634 = vmatpush1.msra.mxu0 0.0
    %1635 = vmatprep.subr.mxu0 0.0
    %1636 = vmatpush1.msra.mxu0 0.0
    %1637 = vmatprep.subr.mxu0 0.0
    %1638 = vmatpush1.msra.mxu0 0.0
    %1639 = vmatprep.subr.mxu0 0.0
    %1640 = vmatpush1.msra.mxu0 0.0
    %1641 = vmatprep.subr.mxu0 0.0
    %1642 = vmatpush1.msra.mxu0 0.0
    %1643 = vmatprep.subr.mxu0 0.0
    %1644 = vmatpush1.msra.mxu0 0.0
    %1645 = vmatprep.subr.mxu0 0.0
    %1646 = vmatpush1.msra.mxu0 0.0
    %1647 = vmatprep.subr.mxu0 0.0
    %1648 = vmatpush1.msra.mxu0 0.0
    %1649 = vmatprep.subr.mxu0 0.0
    %1650 = vmatpush1.msra.mxu0 0.0
    %1651 = vmatprep.subr.mxu0 0.0
    %1652 = vmatpush1.msra.mxu0 0.0
    %1653 = vmatprep.subr.mxu0 0.0
    %1654 = vmatpush1.msra.mxu0 0.0
    %1655 = vmatprep.subr.mxu0 0.0
    %1656 = vmatpush1.msra.mxu0 0.0
    %1657 = vmatprep.subr.mxu0 0.0
    %1658 = vmatpush1.msra.mxu0 0.0
    %1659 = vmatprep.subr.mxu0 0.0
    %1660 = vmatpush1.msra.mxu0 0.0
    %1661 = vmatprep.subr.mxu0 0.0
    %1662 = vmatpush1.msra.mxu0 0.0
    %1663 = vmatprep.mubr.f32.mxu0 0.0
    %1664 = vmatmul.mubr.f32.gmra.mrb[0].mxu0 %v1588
    %v1665 = vpop.f32.mrb[0].mxu0
    %v1666 = vadd.f32 0.0, %v1665
    %v1667 = vpop.f32.mrb[0].mxu0
    %1668 = vmatprep.mubr.f32.mxu0 0.0
    %1669 = vmatmul.mubr.f32.gmra.mrb[0].mxu0 %v1591
    %v1670 = vpop.f32.mrb[0].mxu0
    %v1671 = vadd.f32 0.0, %v1670
    %v1672 = vpop.f32.mrb[0].mxu0
    %1673 = vmatprep.mubr.f32.mxu0 0.0
    %1674 = vmatmul.mubr.f32.gmra.mrb[0].mxu0 %v1594
    %v1675 = vpop.f32.mrb[0].mxu0
    %v1676 = vadd.f32 0.0, %v1675
    %v1677 = vpop.f32.mrb[0].mxu0
    %1678 = vmatprep.mubr.f32.mxu0 0.0
    %1679 = vmatmul.mubr.f32.gmra.mrb[0].mxu0 %v1597
    %v1680 = vpop.f32.mrb[0].mxu0
    %v1681 = vadd.f32 0.0, %v1680
    %v1682 = vpop.f32.mrb[0].mxu0
    %1683 = vdwg.mxu0
    %v1685 = vsel %vm137, %v1579, 0
    %v1688 = vsel %vm137, %v1580, 0
    %v1691 = vsel %vm137, %v1581, 0
    %v1694 = vsel %vm137, %v1582, 0
    %1696 = vmatprep.subr.mxu0 0.0
    %1697 = vmatpush1.msra.mxu0 %v129
    %1698 = vmatprep.subr.mxu0 0.0
    %1699 = vmatpush1.msra.mxu0 %v130
    %1700 = vmatprep.subr.mxu0 0.0
    %1701 = vmatpush1.msra.mxu0 0.0
    %1702 = vmatprep.subr.mxu0 0.0
    %1703 = vmatpush1.msra.mxu0 0.0
    %1704 = vmatprep.subr.mxu0 0.0
    %1705 = vmatpush1.msra.mxu0 0.0
    %1706 = vmatprep.subr.mxu0 0.0
    %1707 = vmatpush1.msra.mxu0 0.0
    %1708 = vmatprep.subr.mxu0 0.0
    %1709 = vmatpush1.msra.mxu0 0.0
    %1710 = vmatprep.subr.mxu0 0.0
    %1711 = vmatpush1.msra.mxu0 0.0
    %1712 = vmatprep.subr.mxu0 0.0
    %1713 = vmatpush1.msra.mxu0 0.0
    %1714 = vmatprep.subr.mxu0 0.0
    %1715 = vmatpush1.msra.mxu0 0.0
    %1716 = vmatprep.subr.mxu0 0.0
    %1717 = vmatpush1.msra.mxu0 0.0
    %1718 = vmatprep.subr.mxu0 0.0
    %1719 = vmatpush1.msra.mxu0 0.0
    %1720 = vmatprep.subr.mxu0 0.0
    %1721 = vmatpush1.msra.mxu0 0.0
    %1722 = vmatprep.subr.mxu0 0.0
    %1723 = vmatpush1.msra.mxu0 0.0
    %1724 = vmatprep.subr.mxu0 0.0
    %1725 = vmatpush1.msra.mxu0 0.0
    %1726 = vmatprep.subr.mxu0 0.0
    %1727 = vmatpush1.msra.mxu0 0.0
    %1728 = vmatprep.subr.mxu0 0.0
    %1729 = vmatpush1.msra.mxu0 0.0
    %1730 = vmatprep.subr.mxu0 0.0
    %1731 = vmatpush1.msra.mxu0 0.0
    %1732 = vmatprep.subr.mxu0 0.0
    %1733 = vmatpush1.msra.mxu0 0.0
    %1734 = vmatprep.subr.mxu0 0.0
    %1735 = vmatpush1.msra.mxu0 0.0
    %1736 = vmatprep.subr.mxu0 0.0
    %1737 = vmatpush1.msra.mxu0 0.0
    %1738 = vmatprep.subr.mxu0 0.0
    %1739 = vmatpush1.msra.mxu0 0.0
    %1740 = vmatprep.subr.mxu0 0.0
    %1741 = vmatpush1.msra.mxu0 0.0
    %1742 = vmatprep.subr.mxu0 0.0
    %1743 = vmatpush1.msra.mxu0 0.0
    %1744 = vmatprep.subr.mxu0 0.0
    %1745 = vmatpush1.msra.mxu0 0.0
    %1746 = vmatprep.subr.mxu0 0.0
    %1747 = vmatpush1.msra.mxu0 0.0
    %1748 = vmatprep.subr.mxu0 0.0
    %1749 = vmatpush1.msra.mxu0 0.0
    %1750 = vmatprep.subr.mxu0 0.0
    %1751 = vmatpush1.msra.mxu0 0.0
    %1752 = vmatprep.subr.mxu0 0.0
    %1753 = vmatpush1.msra.mxu0 0.0
    %1754 = vmatprep.subr.mxu0 0.0
    %1755 = vmatpush1.msra.mxu0 0.0
    %1756 = vmatprep.subr.mxu0 0.0
    %1757 = vmatpush1.msra.mxu0 0.0
    %1758 = vmatprep.subr.mxu0 0.0
    %1759 = vmatpush1.msra.mxu0 0.0
    %1760 = vmatprep.mubr.f32.mxu0 0.0
    %1761 = vmatmul.mubr.f32.gmra.mrb[0].mxu0 %v1685
    %v1762 = vpop.f32.mrb[0].mxu0
    %v1763 = vadd.f32 %v1666, %v1762
    %v1764 = vpop.f32.mrb[0].mxu0
    %1765 = vmatprep.mubr.f32.mxu0 0.0
    %1766 = vmatmul.mubr.f32.gmra.mrb[0].mxu0 %v1688
    %v1767 = vpop.f32.mrb[0].mxu0
    %v1768 = vadd.f32 %v1671, %v1767
    %v1769 = vpop.f32.mrb[0].mxu0
    %1770 = vmatprep.mubr.f32.mxu0 0.0
    %1771 = vmatmul.mubr.f32.gmra.mrb[0].mxu0 %v1691
    %v1772 = vpop.f32.mrb[0].mxu0
    %v1773 = vadd.f32 %v1676, %v1772
    %v1774 = vpop.f32.mrb[0].mxu0
    %1775 = vmatprep.mubr.f32.mxu0 0.0
    %1776 = vmatmul.mubr.f32.gmra.mrb[0].mxu0 %v1694
    %v1777 = vpop.f32.mrb[0].mxu0
    %v1778 = vadd.f32 %v1681, %v1777
    %v1779 = vpop.f32.mrb[0].mxu0
    %1780 = vdwg.mxu0
    %1781 = vst.msk [vmem:[#allocation16] sm:$0xff] %vm137, %v1763
    %1782 = vst.msk [vmem:[#allocation16 + $0x8] sm:$0xff] %vm137, %v1768
    %1783 = vst.msk [vmem:[#allocation16 + $0x10] sm:$0xff] %vm137, %v1773
    %1784 = vst.msk [vmem:[#allocation16 + $0x18] sm:$0xff] %vm137, %v1778
    // Predicated region
    $region62: #{tpu_custom_call.1} parent=1 // pred_check
      _
    $region63: #{tpu_custom_call.1} parent=1 // pred_check_branch
      %1786 = sbr.rel (0) target = $region65
    $region64: #{tpu_custom_call.1} parent=1 // pred_region
      %s1788 = ssub.s32 512, 512
      %1789 = vsyncadd [#allocation6], %s1788
      %s1790 = sshll.u32 [#allocation16], 4
      %s1791 = int_to_ptr.vmem [resolvable:$true] %s1790
      %1796 = dma.vmem_to_hbm [thread:$0]  %s1791, 512, %s8, [#allocation6], 128, 128, 8
    $region65: #{tpu_custom_call.1} parent=1 // pred_fallthru
      _
    // Predicated region
    $region66: #{tpu_custom_call.1} parent=1 // pred_check
      _
    $region67: #{tpu_custom_call.1} parent=1 // pred_check_branch
      %1798 = sbr.rel (0) target = $region69
    $region68: #{tpu_custom_call.1} parent=1 // pred_region
      %1799 = dma.done [#allocation6], 512
    $region69: #{tpu_custom_call.1} parent=1 // pred_fallthru
      _
    %1800 = vsyncpa [#allocation5], 1
    %1801 = vsyncpa [#allocation8], 1
    %1802 = vsyncpa [#allocation11], 1
    %1803 = vsyncpa [#allocation14], 1
    %1804 = vsyncpa [#allocation6], 1

</llo_original>
